<compile_context>
chip_gen: v7x
topology: tpu7x:2x2x1
jax: 0.10.0
libtpu: 0.0.40
codegen_flags: <defaults>
</compile_context>

<pallas_src>
import jax
import jax.numpy as jnp
from jax.experimental import pallas as pl
from jax.experimental.pallas import tpu as pltpu

EPS = 1e-5


def basic_block_kernel(x_ref, sup_ref, sdn_ref, wm1_ref, wm2_ref, pool_ref,
                       g1_ref, b1_ref, g2_ref, b2_ref, o_ref):
    """Lane-dense fused BasicBlock.

    x_ref   : (R, L) f32    activations, R = N*H rows, L = W*C lanes
    sup_ref : (R, R) bf16   row-shift matrix (source row r-1, zero across edges)
    sdn_ref : (R, R) bf16   row-shift matrix (source row r+1, zero across edges)
    wm*_ref : (3, L, L) bf16 banded conv weights, one (L, L) slab per ky tap
    pool_ref: (L, L) f32    per-channel pooling + broadcast matrix (incl. 1/NHW)
    g*_ref, b*_ref : (1, L) f32 BN affine params tiled over the W groups
    o_ref   : (R, L) f32    output (lane-dense store)
    """
    x_f = x_ref[...]                       # f32 identity for the residual
    x_b = x_f.astype(jnp.bfloat16)         # bf16 operand for the MXU
    sup = sup_ref[...]
    sdn = sdn_ref[...]
    pool = pool_ref[...]

    def conv3x3(xb, wm_ref):
        # ky = 0/1/2  <->  source row r-1 / r / r+1.  The shift matmuls are
        # exact (0/1 matrices), the band matmuls accumulate in f32 on the MXU.
        x_up = jnp.dot(sup, xb, preferred_element_type=jnp.float32).astype(jnp.bfloat16)
        x_dn = jnp.dot(sdn, xb, preferred_element_type=jnp.float32).astype(jnp.bfloat16)
        acc = jnp.dot(xb, wm_ref[1], preferred_element_type=jnp.float32)
        acc += jnp.dot(x_up, wm_ref[0], preferred_element_type=jnp.float32)
        acc += jnp.dot(x_dn, wm_ref[2], preferred_element_type=jnp.float32)
        return acc                         # (R, L) f32

    def batch_norm(y, g_ref, b_ref):
        # Training-mode (biased-variance) BN, statistics in f32.  `pool` sums
        # over the W lane-groups per channel and broadcasts the result back to
        # every lane, so mean / ex2 are directly usable elementwise.
        mean = jnp.sum(jnp.dot(y, pool, preferred_element_type=jnp.float32),
                       axis=0, keepdims=True)
        ex2 = jnp.sum(jnp.dot(y * y, pool, preferred_element_type=jnp.float32),
                      axis=0, keepdims=True)
        var = jnp.maximum(ex2 - mean * mean, 0.0)
        inv = jax.lax.rsqrt(var + EPS)
        return (y - mean) * (inv * g_ref[...]) + b_ref[...]

    # conv1 -> bn1 -> relu
    h = conv3x3(x_b, wm1_ref)
    h = batch_norm(h, g1_ref, b1_ref)
    h = jnp.maximum(h, 0.0)

    # conv2 -> bn2
    h = conv3x3(h.astype(jnp.bfloat16), wm2_ref)
    h = batch_norm(h, g2_ref, b2_ref)

    # residual add + relu, lane-dense f32 store
    o_ref[...] = jnp.maximum(h + x_f, 0.0)


def _band_weights(w_oihw, W):
    """Fold the kx taps and the W axis of a 3x3 conv weight into 3 banded
    (W*Cin, W*Cout) matrices (one per ky tap).  Trace-time only (free)."""
    w_hwio = jnp.transpose(w_oihw, (2, 3, 1, 0)).astype(jnp.float32)  # (3,3,Ci,Co)
    cin, cout = w_hwio.shape[2], w_hwio.shape[3]
    mats = []
    for ky in range(3):
        m = jnp.zeros((W * cin, W * cout), jnp.float32)
        for kx in range(3):
            # S[w', w] = 1  iff  w' == w + kx - 1  (edge zero-padding implicit)
            s = jnp.eye(W, W, k=1 - kx, dtype=jnp.float32)
            m = m + jnp.kron(s, w_hwio[ky, kx])
        mats.append(m)
    return jnp.stack(mats).astype(jnp.bfloat16)      # (3, W*Cin, W*Cout)


def _row_shift_matrices(N, H):
    """Exact image-local row shifts: zero at image top/bottom and across
    batch boundaries (block-diagonal per image)."""
    up = jnp.kron(jnp.eye(N, dtype=jnp.float32),
                  jnp.eye(H, H, k=-1, dtype=jnp.float32))   # picks row r-1
    dn = jnp.kron(jnp.eye(N, dtype=jnp.float32),
                  jnp.eye(H, H, k=1, dtype=jnp.float32))    # picks row r+1
    return up.astype(jnp.bfloat16), dn.astype(jnp.bfloat16)


def basic_block(x_nchw, w1_oihw, g1, b1, w2_oihw, g2, b2):
    """BasicBlock forward (stride=1, downsample=None).  NCHW in / NCHW out."""
    N, C, H, W = x_nchw.shape
    R, L = N * H, W * C

    # NCHW -> NHWC -> lane-dense (N*H, W*C) (contiguous reshape, free).
    x2d = jnp.transpose(x_nchw, (0, 2, 3, 1)).reshape(R, L).astype(jnp.float32)

    wm1 = _band_weights(w1_oihw, W)
    wm2 = _band_weights(w2_oihw, W)
    sup, sdn = _row_shift_matrices(N, H)

    # Per-channel pooling + broadcast matrix for the BN statistics.
    pool = jnp.kron(jnp.ones((W, W), jnp.float32),
                    jnp.eye(C, dtype=jnp.float32)) / float(N * H * W)

    def lanes(v):  # (C,) -> (1, W*C), value v[lane % C]
        return jnp.tile(v.astype(jnp.float32), W).reshape(1, L)

    vmem = pl.BlockSpec(memory_space=pltpu.MemorySpace.VMEM)
    out2d = pl.pallas_call(
        basic_block_kernel,
        out_shape=jax.ShapeDtypeStruct((R, L), jnp.float32),
        in_specs=[vmem] * 10,
        out_specs=vmem,
    )(x2d, sup, sdn, wm1, wm2, pool, lanes(g1), lanes(b1), lanes(g2), lanes(b2))

    # (N*H, W*C) -> NHWC -> NCHW
    return jnp.transpose(out2d.reshape(N, H, W, C), (0, 3, 1, 2))


def reference_block(x_nchw, w1_oihw, g1, b1, w2_oihw, g2, b2):
    """Pure-JAX f32 reference matching the PyTorch module (training-mode BN)."""
    x = jnp.transpose(x_nchw, (0, 2, 3, 1))
    w1 = jnp.transpose(w1_oihw, (2, 3, 1, 0))
    w2 = jnp.transpose(w2_oihw, (2, 3, 1, 0))

    def conv(inp, w):
        return jax.lax.conv_general_dilated(
            inp, w, window_strides=(1, 1), padding="SAME",
            dimension_numbers=("NHWC", "HWIO", "NHWC"))

    def bn(y, g, b):
        m = y.mean(axis=(0, 1, 2), keepdims=True)
        v = ((y - m) ** 2).mean(axis=(0, 1, 2), keepdims=True)
        return (y - m) / jnp.sqrt(v + EPS) * g.reshape(1, 1, 1, -1) + b.reshape(1, 1, 1, -1)

    h = jax.nn.relu(bn(conv(x, w1), g1, b1))
    h = bn(conv(h, w2), g2, b2)
    out = jax.nn.relu(h + x)
    return jnp.transpose(out, (0, 3, 1, 2))


if __name__ == "__main__":
    # in_channel == out_channel, stride=1, no downsample; W*C = 128 lanes.
    N, C, H, W = 2, 8, 16, 16

    key = jax.random.PRNGKey(0)
    kx, kw1, kw2, kg1, kb1, kg2, kb2 = jax.random.split(key, 7)

    x = jax.random.normal(kx, (N, C, H, W), jnp.float32)
    # PyTorch Conv2d weight layout: (out_channel, in_channel, kH, kW), bias=False
    w1 = jax.random.normal(kw1, (C, C, 3, 3), jnp.float32) * 0.1
    w2 = jax.random.normal(kw2, (C, C, 3, 3), jnp.float32) * 0.1
    # BatchNorm affine params (deterministic, non-trivial)
    g1 = 1.0 + 0.1 * jax.random.normal(kg1, (C,), jnp.float32)
    b1 = 0.1 * jax.random.normal(kb1, (C,), jnp.float32)
    g2 = 1.0 + 0.1 * jax.random.normal(kg2, (C,), jnp.float32)
    b2 = 0.1 * jax.random.normal(kb2, (C,), jnp.float32)

    out = basic_block(x, w1, g1, b1, w2, g2, b2)
    out = jax.block_until_ready(out)

    ref = reference_block(x, w1, g1, b1, w2, g2, b2)
    assert out.shape == (N, C, H, W)
    # bf16 MXU operands (per perf review) -> relaxed tolerance vs f32 reference.
    assert jnp.allclose(out, ref, atol=5e-2, rtol=5e-2), (
        float(jnp.max(jnp.abs(out - ref))))

    print("KERNEL_OK")
</pallas_src>

<mosaic_0001>
module attributes {stable_mosaic.version = 11 : i64} {
  func.func @basic_block_kernel(%arg0: memref<32x128xf32, #tpu.memory_space<vmem>>, %arg1: memref<32x32xbf16, #tpu.memory_space<vmem>>, %arg2: memref<32x32xbf16, #tpu.memory_space<vmem>>, %arg3: memref<3x128x128xbf16, #tpu.memory_space<vmem>>, %arg4: memref<3x128x128xbf16, #tpu.memory_space<vmem>>, %arg5: memref<128x128xf32, #tpu.memory_space<vmem>>, %arg6: memref<1x128xf32, #tpu.memory_space<vmem>>, %arg7: memref<1x128xf32, #tpu.memory_space<vmem>>, %arg8: memref<1x128xf32, #tpu.memory_space<vmem>>, %arg9: memref<1x128xf32, #tpu.memory_space<vmem>>, %arg10: memref<32x128xf32, #tpu.memory_space<vmem>>) attributes {dimension_semantics = [], scalar_prefetch = 0 : i64, scratch_operands = 0 : i64, tpu.core_type = #tpu.core_type<tc>} {
    %c0 = arith.constant 0 : index
    %c0_0 = arith.constant 0 : index
    %0 = vector.load %arg0[%c0, %c0_0] : memref<32x128xf32, #tpu.memory_space<vmem>>, vector<32x128xf32>
    %1 = arith.truncf %0 : vector<32x128xf32> to vector<32x128xbf16>
    %c0_1 = arith.constant 0 : index
    %c0_2 = arith.constant 0 : index
    %2 = vector.load %arg1[%c0_1, %c0_2] : memref<32x32xbf16, #tpu.memory_space<vmem>>, vector<32x32xbf16>
    %c0_3 = arith.constant 0 : index
    %c0_4 = arith.constant 0 : index
    %3 = vector.load %arg2[%c0_3, %c0_4] : memref<32x32xbf16, #tpu.memory_space<vmem>>, vector<32x32xbf16>
    %c0_5 = arith.constant 0 : index
    %c0_6 = arith.constant 0 : index
    %4 = vector.load %arg5[%c0_5, %c0_6] : memref<128x128xf32, #tpu.memory_space<vmem>>, vector<128x128xf32>
    %cst = arith.constant dense<0.000000e+00> : vector<32x128xf32>
    %5 = tpu.matmul %2, %1, %cst {dimension_numbers = #tpu.dot_dimension_numbers<[1], [0], [0], [1], [0, 0, 1, 1], [], []>} : vector<32x32xbf16>, vector<32x128xbf16>, vector<32x128xf32> -> vector<32x128xf32>
    %6 = arith.truncf %5 : vector<32x128xf32> to vector<32x128xbf16>
    %cst_7 = arith.constant dense<0.000000e+00> : vector<32x128xf32>
    %7 = tpu.matmul %3, %1, %cst_7 {dimension_numbers = #tpu.dot_dimension_numbers<[1], [0], [0], [1], [0, 0, 1, 1], [], []>} : vector<32x32xbf16>, vector<32x128xbf16>, vector<32x128xf32> -> vector<32x128xf32>
    %8 = arith.truncf %7 : vector<32x128xf32> to vector<32x128xbf16>
    %c1 = arith.constant 1 : index
    %c0_8 = arith.constant 0 : index
    %c0_9 = arith.constant 0 : index
    %9 = vector.load %arg3[%c1, %c0_8, %c0_9] : memref<3x128x128xbf16, #tpu.memory_space<vmem>>, vector<1x128x128xbf16>
    %10 = vector.shape_cast %9 : vector<1x128x128xbf16> to vector<128x128xbf16>
    %cst_10 = arith.constant dense<0.000000e+00> : vector<32x128xf32>
    %11 = tpu.matmul %1, %10, %cst_10 {dimension_numbers = #tpu.dot_dimension_numbers<[1], [0], [0], [1], [0, 0, 1, 1], [], []>} : vector<32x128xbf16>, vector<128x128xbf16>, vector<32x128xf32> -> vector<32x128xf32>
    %c0_11 = arith.constant 0 : index
    %c0_12 = arith.constant 0 : index
    %c0_13 = arith.constant 0 : index
    %12 = vector.load %arg3[%c0_11, %c0_12, %c0_13] : memref<3x128x128xbf16, #tpu.memory_space<vmem>>, vector<1x128x128xbf16>
    %13 = vector.shape_cast %12 : vector<1x128x128xbf16> to vector<128x128xbf16>
    %cst_14 = arith.constant dense<0.000000e+00> : vector<32x128xf32>
    %14 = tpu.matmul %6, %13, %cst_14 {dimension_numbers = #tpu.dot_dimension_numbers<[1], [0], [0], [1], [0, 0, 1, 1], [], []>} : vector<32x128xbf16>, vector<128x128xbf16>, vector<32x128xf32> -> vector<32x128xf32>
    %15 = arith.addf %11, %14 : vector<32x128xf32>
    %c2 = arith.constant 2 : index
    %c0_15 = arith.constant 0 : index
    %c0_16 = arith.constant 0 : index
    %16 = vector.load %arg3[%c2, %c0_15, %c0_16] : memref<3x128x128xbf16, #tpu.memory_space<vmem>>, vector<1x128x128xbf16>
    %17 = vector.shape_cast %16 : vector<1x128x128xbf16> to vector<128x128xbf16>
    %cst_17 = arith.constant dense<0.000000e+00> : vector<32x128xf32>
    %18 = tpu.matmul %8, %17, %cst_17 {dimension_numbers = #tpu.dot_dimension_numbers<[1], [0], [0], [1], [0, 0, 1, 1], [], []>} : vector<32x128xbf16>, vector<128x128xbf16>, vector<32x128xf32> -> vector<32x128xf32>
    %19 = arith.addf %15, %18 : vector<32x128xf32>
    %cst_18 = arith.constant dense<0.000000e+00> : vector<32x128xf32>
    %20 = tpu.matmul %19, %4, %cst_18 {dimension_numbers = #tpu.dot_dimension_numbers<[1], [0], [0], [1], [0, 0, 1, 1], [], []>} : vector<32x128xf32>, vector<128x128xf32>, vector<32x128xf32> -> vector<32x128xf32>
    %cst_19 = arith.constant dense<0.000000e+00> : vector<128xf32>
    %21 = vector.multi_reduction <add>, %20, %cst_19 [0] : vector<32x128xf32> to vector<128xf32>
    %22 = vector.shape_cast %21 : vector<128xf32> to vector<1x128xf32>
    %23 = arith.mulf %19, %19 : vector<32x128xf32>
    %cst_20 = arith.constant dense<0.000000e+00> : vector<32x128xf32>
    %24 = tpu.matmul %23, %4, %cst_20 {dimension_numbers = #tpu.dot_dimension_numbers<[1], [0], [0], [1], [0, 0, 1, 1], [], []>} : vector<32x128xf32>, vector<128x128xf32>, vector<32x128xf32> -> vector<32x128xf32>
    %cst_21 = arith.constant dense<0.000000e+00> : vector<128xf32>
    %25 = vector.multi_reduction <add>, %24, %cst_21 [0] : vector<32x128xf32> to vector<128xf32>
    %26 = vector.shape_cast %25 : vector<128xf32> to vector<1x128xf32>
    %27 = arith.mulf %22, %22 : vector<1x128xf32>
    %28 = arith.subf %26, %27 : vector<1x128xf32>
    %cst_22 = arith.constant 0.000000e+00 : f32
    %29 = vector.broadcast %cst_22 : f32 to vector<1x128xf32>
    %30 = arith.maximumf %28, %29 : vector<1x128xf32>
    %cst_23 = arith.constant 9.99999974E-6 : f32
    %31 = vector.broadcast %cst_23 : f32 to vector<1x128xf32>
    %32 = arith.addf %30, %31 : vector<1x128xf32>
    %33 = math.rsqrt %32 : vector<1x128xf32>
    %34 = vector.broadcast %22 : vector<1x128xf32> to vector<32x128xf32>
    %35 = arith.subf %19, %34 : vector<32x128xf32>
    %c0_24 = arith.constant 0 : index
    %c0_25 = arith.constant 0 : index
    %36 = vector.load %arg6[%c0_24, %c0_25] : memref<1x128xf32, #tpu.memory_space<vmem>>, vector<1x128xf32>
    %37 = arith.mulf %33, %36 : vector<1x128xf32>
    %38 = vector.broadcast %37 : vector<1x128xf32> to vector<32x128xf32>
    %39 = arith.mulf %35, %38 : vector<32x128xf32>
    %c0_26 = arith.constant 0 : index
    %c0_27 = arith.constant 0 : index
    %40 = vector.load %arg7[%c0_26, %c0_27] : memref<1x128xf32, #tpu.memory_space<vmem>>, vector<1x128xf32>
    %41 = vector.broadcast %40 : vector<1x128xf32> to vector<32x128xf32>
    %42 = arith.addf %39, %41 : vector<32x128xf32>
    %cst_28 = arith.constant 0.000000e+00 : f32
    %43 = vector.broadcast %cst_28 : f32 to vector<32x128xf32>
    %44 = arith.maximumf %42, %43 : vector<32x128xf32>
    %45 = arith.truncf %44 : vector<32x128xf32> to vector<32x128xbf16>
    %cst_29 = arith.constant dense<0.000000e+00> : vector<32x128xf32>
    %46 = tpu.matmul %2, %45, %cst_29 {dimension_numbers = #tpu.dot_dimension_numbers<[1], [0], [0], [1], [0, 0, 1, 1], [], []>} : vector<32x32xbf16>, vector<32x128xbf16>, vector<32x128xf32> -> vector<32x128xf32>
    %47 = arith.truncf %46 : vector<32x128xf32> to vector<32x128xbf16>
    %cst_30 = arith.constant dense<0.000000e+00> : vector<32x128xf32>
    %48 = tpu.matmul %3, %45, %cst_30 {dimension_numbers = #tpu.dot_dimension_numbers<[1], [0], [0], [1], [0, 0, 1, 1], [], []>} : vector<32x32xbf16>, vector<32x128xbf16>, vector<32x128xf32> -> vector<32x128xf32>
    %49 = arith.truncf %48 : vector<32x128xf32> to vector<32x128xbf16>
    %c1_31 = arith.constant 1 : index
    %c0_32 = arith.constant 0 : index
    %c0_33 = arith.constant 0 : index
    %50 = vector.load %arg4[%c1_31, %c0_32, %c0_33] : memref<3x128x128xbf16, #tpu.memory_space<vmem>>, vector<1x128x128xbf16>
    %51 = vector.shape_cast %50 : vector<1x128x128xbf16> to vector<128x128xbf16>
    %cst_34 = arith.constant dense<0.000000e+00> : vector<32x128xf32>
    %52 = tpu.matmul %45, %51, %cst_34 {dimension_numbers = #tpu.dot_dimension_numbers<[1], [0], [0], [1], [0, 0, 1, 1], [], []>} : vector<32x128xbf16>, vector<128x128xbf16>, vector<32x128xf32> -> vector<32x128xf32>
    %c0_35 = arith.constant 0 : index
    %c0_36 = arith.constant 0 : index
    %c0_37 = arith.constant 0 : index
    %53 = vector.load %arg4[%c0_35, %c0_36, %c0_37] : memref<3x128x128xbf16, #tpu.memory_space<vmem>>, vector<1x128x128xbf16>
    %54 = vector.shape_cast %53 : vector<1x128x128xbf16> to vector<128x128xbf16>
    %cst_38 = arith.constant dense<0.000000e+00> : vector<32x128xf32>
    %55 = tpu.matmul %47, %54, %cst_38 {dimension_numbers = #tpu.dot_dimension_numbers<[1], [0], [0], [1], [0, 0, 1, 1], [], []>} : vector<32x128xbf16>, vector<128x128xbf16>, vector<32x128xf32> -> vector<32x128xf32>
    %56 = arith.addf %52, %55 : vector<32x128xf32>
    %c2_39 = arith.constant 2 : index
    %c0_40 = arith.constant 0 : index
    %c0_41 = arith.constant 0 : index
    %57 = vector.load %arg4[%c2_39, %c0_40, %c0_41] : memref<3x128x128xbf16, #tpu.memory_space<vmem>>, vector<1x128x128xbf16>
    %58 = vector.shape_cast %57 : vector<1x128x128xbf16> to vector<128x128xbf16>
    %cst_42 = arith.constant dense<0.000000e+00> : vector<32x128xf32>
    %59 = tpu.matmul %49, %58, %cst_42 {dimension_numbers = #tpu.dot_dimension_numbers<[1], [0], [0], [1], [0, 0, 1, 1], [], []>} : vector<32x128xbf16>, vector<128x128xbf16>, vector<32x128xf32> -> vector<32x128xf32>
    %60 = arith.addf %56, %59 : vector<32x128xf32>
    %cst_43 = arith.constant dense<0.000000e+00> : vector<32x128xf32>
    %61 = tpu.matmul %60, %4, %cst_43 {dimension_numbers = #tpu.dot_dimension_numbers<[1], [0], [0], [1], [0, 0, 1, 1], [], []>} : vector<32x128xf32>, vector<128x128xf32>, vector<32x128xf32> -> vector<32x128xf32>
    %cst_44 = arith.constant dense<0.000000e+00> : vector<128xf32>
    %62 = vector.multi_reduction <add>, %61, %cst_44 [0] : vector<32x128xf32> to vector<128xf32>
    %63 = vector.shape_cast %62 : vector<128xf32> to vector<1x128xf32>
    %64 = arith.mulf %60, %60 : vector<32x128xf32>
    %cst_45 = arith.constant dense<0.000000e+00> : vector<32x128xf32>
    %65 = tpu.matmul %64, %4, %cst_45 {dimension_numbers = #tpu.dot_dimension_numbers<[1], [0], [0], [1], [0, 0, 1, 1], [], []>} : vector<32x128xf32>, vector<128x128xf32>, vector<32x128xf32> -> vector<32x128xf32>
    %cst_46 = arith.constant dense<0.000000e+00> : vector<128xf32>
    %66 = vector.multi_reduction <add>, %65, %cst_46 [0] : vector<32x128xf32> to vector<128xf32>
    %67 = vector.shape_cast %66 : vector<128xf32> to vector<1x128xf32>
    %68 = arith.mulf %63, %63 : vector<1x128xf32>
    %69 = arith.subf %67, %68 : vector<1x128xf32>
    %cst_47 = arith.constant 0.000000e+00 : f32
    %70 = vector.broadcast %cst_47 : f32 to vector<1x128xf32>
    %71 = arith.maximumf %69, %70 : vector<1x128xf32>
    %cst_48 = arith.constant 9.99999974E-6 : f32
    %72 = vector.broadcast %cst_48 : f32 to vector<1x128xf32>
    %73 = arith.addf %71, %72 : vector<1x128xf32>
    %74 = math.rsqrt %73 : vector<1x128xf32>
    %75 = vector.broadcast %63 : vector<1x128xf32> to vector<32x128xf32>
    %76 = arith.subf %60, %75 : vector<32x128xf32>
    %c0_49 = arith.constant 0 : index
    %c0_50 = arith.constant 0 : index
    %77 = vector.load %arg8[%c0_49, %c0_50] : memref<1x128xf32, #tpu.memory_space<vmem>>, vector<1x128xf32>
    %78 = arith.mulf %74, %77 : vector<1x128xf32>
    %79 = vector.broadcast %78 : vector<1x128xf32> to vector<32x128xf32>
    %80 = arith.mulf %76, %79 : vector<32x128xf32>
    %c0_51 = arith.constant 0 : index
    %c0_52 = arith.constant 0 : index
    %81 = vector.load %arg9[%c0_51, %c0_52] : memref<1x128xf32, #tpu.memory_space<vmem>>, vector<1x128xf32>
    %82 = vector.broadcast %81 : vector<1x128xf32> to vector<32x128xf32>
    %83 = arith.addf %80, %82 : vector<32x128xf32>
    %84 = arith.addf %83, %0 : vector<32x128xf32>
    %cst_53 = arith.constant 0.000000e+00 : f32
    %85 = vector.broadcast %cst_53 : f32 to vector<32x128xf32>
    %86 = arith.maximumf %84, %85 : vector<32x128xf32>
    %c0_54 = arith.constant 0 : index
    %c0_55 = arith.constant 0 : index
    %87 = vector.load %arg10[%c0_54, %c0_55] : memref<32x128xf32, #tpu.memory_space<vmem>>, vector<32x128xf32>
    tpu.vector_store %arg10[%c0_54, %c0_55], %86 {strides = array<i32>} : memref<32x128xf32, #tpu.memory_space<vmem>>, vector<32x128xf32>,
    return
  }
}

</mosaic_0001>

<llo_original>
// kernel: tpu_custom_call.1
$region0: #{tpu_custom_call.1}
  #allocation0 [shape = 'u32[]', space=smem, size = 0x4, offset = 0x4, fixed_abs, tag = 'smem constant byte address 0x4 - core index']
  #allocation1 [shape = 'u32[144,128]{1,0:T(1,128)}', space=vmem, size = 0x12000, scoped, tag = 'internal scratch']
  %s0 = inlined_call_operand.hbm [shape: f32[32,128], index: 0, kind: input, shape index: {}]
  %s1 = inlined_call_operand.hbm [shape: bf16[32,32], index: 1, kind: input, shape index: {}]
  %s2 = inlined_call_operand.hbm [shape: bf16[32,32], index: 2, kind: input, shape index: {}]
  %s3 = inlined_call_operand.hbm [shape: bf16[3,128,128], index: 3, kind: input, shape index: {}]
  %s4 = inlined_call_operand.hbm [shape: bf16[3,128,128], index: 4, kind: input, shape index: {}]
  %s5 = inlined_call_operand.hbm [shape: f32[128,128], index: 5, kind: input, shape index: {}]
  %s6 = inlined_call_operand.vmem [shape: f32[1,128], index: 6, kind: input, shape index: {}]
  %s7 = inlined_call_operand.vmem [shape: f32[1,128], index: 7, kind: input, shape index: {}]
  %s8 = inlined_call_operand.vmem [shape: f32[1,128], index: 8, kind: input, shape index: {}]
  %s9 = inlined_call_operand.vmem [shape: f32[1,128], index: 9, kind: input, shape index: {}]
  %s10 = inlined_call_operand.hbm [shape: f32[32,128], index: 10, kind: output, shape index: {}]
  %s11 = sld [smem:[#allocation0]]
  $region74: #{tpu_custom_call.1} parent=0
    _
  %s13 = ssub.s32 1, %s11
  %s14 = scalar_select 0, %s13, %s11
  $region1: #{tpu_custom_call.1} parent=0
    #allocation2 [shape = 'u8[16384]{0}', space=vmem, size = 0x4000, scoped, tag = 'input window, operand 0, single buffered']
    #allocation3 [shape = 's32[1]{0}', space=sflag, size = 0x4, scoped, tag = 'scoped memory for tpu_custom_call.1']
    #allocation4 [shape = 's32[1]{0}', space=sflag, size = 0x4, scoped, tag = 'scoped memory for tpu_custom_call.1']
    #allocation5 [shape = 'u8[8192]{0}', space=vmem, size = 0x2000, scoped, tag = 'input window, operand 1, single buffered']
    #allocation6 [shape = 's32[1]{0}', space=sflag, size = 0x4, scoped, tag = 'scoped memory for tpu_custom_call.1']
    #allocation7 [shape = 'u8[8192]{0}', space=vmem, size = 0x2000, scoped, tag = 'input window, operand 2, single buffered']
    #allocation8 [shape = 'u8[98304]{0}', space=vmem, size = 0x18000, scoped, tag = 'input window, operand 3, single buffered']
    #allocation9 [shape = 's32[1]{0}', space=sflag, size = 0x4, scoped, tag = 'scoped memory for tpu_custom_call.1']
    #allocation10 [shape = 'u8[98304]{0}', space=vmem, size = 0x18000, scoped, tag = 'input window, operand 4, single buffered']
    #allocation11 [shape = 'u8[65536]{0}', space=vmem, size = 0x10000, scoped, tag = 'input window, operand 5, single buffered']
    #allocation12 [shape = 's32[1]{0}', space=sflag, size = 0x4, scoped, tag = 'scoped memory for tpu_custom_call.1']
    #allocation13 [shape = 'u8[16384]{0}', space=vmem, size = 0x4000, scoped, tag = 'output window, operand 0, single buffered']
    %15 = vsyncpa [#allocation3], 0
    %16 = vsyncpa [#allocation6], 0
    %17 = vsyncpa [#allocation9], 0
    %18 = vsyncpa [#allocation12], 0
    %19 = vsyncpa [#allocation4], 0
    // Predicated region
    $region2: #{tpu_custom_call.1} parent=1 // pred_check
      _
    $region3: #{tpu_custom_call.1} parent=1 // pred_check_branch
      %21 = sbr.rel (0) target = $region5
    $region4: #{tpu_custom_call.1} parent=1 // pred_region
      %s23 = ssub.s32 512, 512
      %24 = vsyncadd [#allocation3], %s23
      %s25 = sshll.u32 [#allocation2], 4
      %s26 = int_to_ptr.vmem [resolvable:$true] %s25
      %31 = dma.hbm_to_vmem [thread:$0]  %s0, 512, %s26, [#allocation3], 128, 128, 8
    $region5: #{tpu_custom_call.1} parent=1 // pred_fallthru
      _
    // Predicated region
    $region6: #{tpu_custom_call.1} parent=1 // pred_check
      _
    $region7: #{tpu_custom_call.1} parent=1 // pred_check_branch
      %33 = sbr.rel (0) target = $region9
    $region8: #{tpu_custom_call.1} parent=1 // pred_region
      %s35 = ssub.s32 256, 256
      %36 = vsyncadd [#allocation6], %s35
      %s37 = sshll.u32 [#allocation5], 4
      %s38 = int_to_ptr.vmem [resolvable:$true] %s37
      %43 = dma.hbm_to_vmem [thread:$0]  %s1, 256, %s38, [#allocation6], 64, 64, 4
    $region9: #{tpu_custom_call.1} parent=1 // pred_fallthru
      _
    // Predicated region
    $region10: #{tpu_custom_call.1} parent=1 // pred_check
      _
    $region11: #{tpu_custom_call.1} parent=1 // pred_check_branch
      %45 = sbr.rel (0) target = $region13
    $region12: #{tpu_custom_call.1} parent=1 // pred_region
      %s47 = ssub.s32 256, 256
      %48 = vsyncadd [#allocation6], %s47
      %s49 = sshll.u32 [#allocation7], 4
      %s50 = int_to_ptr.vmem [resolvable:$true] %s49
      %55 = dma.hbm_to_vmem [thread:$0]  %s2, 256, %s50, [#allocation6], 64, 64, 4
    $region13: #{tpu_custom_call.1} parent=1 // pred_fallthru
      _
    // Predicated region
    $region14: #{tpu_custom_call.1} parent=1 // pred_check
      _
    $region15: #{tpu_custom_call.1} parent=1 // pred_check_branch
      %57 = sbr.rel (0) target = $region17
    $region16: #{tpu_custom_call.1} parent=1 // pred_region
      %s59 = ssub.s32 3072, 3072
      %60 = vsyncadd [#allocation9], %s59
      %s61 = sshll.u32 [#allocation8], 4
      %s62 = int_to_ptr.vmem [resolvable:$true] %s61
      %67 = dma.hbm_to_vmem [thread:$0]  %s3, 3072, %s62, [#allocation9], 64, 64, 4
    $region17: #{tpu_custom_call.1} parent=1 // pred_fallthru
      _
    // Predicated region
    $region18: #{tpu_custom_call.1} parent=1 // pred_check
      _
    $region19: #{tpu_custom_call.1} parent=1 // pred_check_branch
      %69 = sbr.rel (0) target = $region21
    $region20: #{tpu_custom_call.1} parent=1 // pred_region
      %s71 = ssub.s32 3072, 3072
      %72 = vsyncadd [#allocation9], %s71
      %s73 = sshll.u32 [#allocation10], 4
      %s74 = int_to_ptr.vmem [resolvable:$true] %s73
      %79 = dma.hbm_to_vmem [thread:$0]  %s4, 3072, %s74, [#allocation9], 64, 64, 4
    $region21: #{tpu_custom_call.1} parent=1 // pred_fallthru
      _
    // Predicated region
    $region22: #{tpu_custom_call.1} parent=1 // pred_check
      _
    $region23: #{tpu_custom_call.1} parent=1 // pred_check_branch
      %81 = sbr.rel (0) target = $region25
    $region24: #{tpu_custom_call.1} parent=1 // pred_region
      %s83 = ssub.s32 2048, 2048
      %84 = vsyncadd [#allocation12], %s83
      %s85 = sshll.u32 [#allocation11], 4
      %s86 = int_to_ptr.vmem [resolvable:$true] %s85
      %91 = dma.hbm_to_vmem [thread:$0]  %s5, 2048, %s86, [#allocation12], 128, 128, 8
    $region25: #{tpu_custom_call.1} parent=1 // pred_fallthru
      _
    // Predicated region
    $region26: #{tpu_custom_call.1} parent=1 // pred_check
      _
    $region27: #{tpu_custom_call.1} parent=1 // pred_check_branch
      %93 = sbr.rel (0) target = $region29
    $region28: #{tpu_custom_call.1} parent=1 // pred_region
      _
    $region29: #{tpu_custom_call.1} parent=1 // pred_fallthru
      _
    // Predicated region
    $region30: #{tpu_custom_call.1} parent=1 // pred_check
      _
    $region31: #{tpu_custom_call.1} parent=1 // pred_check_branch
      %95 = sbr.rel (0) target = $region33
    $region32: #{tpu_custom_call.1} parent=1 // pred_region
      _
    $region33: #{tpu_custom_call.1} parent=1 // pred_fallthru
      _
    // Predicated region
    $region34: #{tpu_custom_call.1} parent=1 // pred_check
      _
    $region35: #{tpu_custom_call.1} parent=1 // pred_check_branch
      %97 = sbr.rel (0) target = $region37
    $region36: #{tpu_custom_call.1} parent=1 // pred_region
      _
    $region37: #{tpu_custom_call.1} parent=1 // pred_fallthru
      _
    // Predicated region
    $region38: #{tpu_custom_call.1} parent=1 // pred_check
      _
    $region39: #{tpu_custom_call.1} parent=1 // pred_check_branch
      %99 = sbr.rel (0) target = $region41
    $region40: #{tpu_custom_call.1} parent=1 // pred_region
      _
    $region41: #{tpu_custom_call.1} parent=1 // pred_fallthru
      _
    // Predicated region
    $region42: #{tpu_custom_call.1} parent=1 // pred_check
      _
    $region43: #{tpu_custom_call.1} parent=1 // pred_check_branch
      %101 = sbr.rel (0) target = $region45
    $region44: #{tpu_custom_call.1} parent=1 // pred_region
      %102 = dma.done [#allocation3], 512
    $region45: #{tpu_custom_call.1} parent=1 // pred_fallthru
      _
    // Predicated region
    $region46: #{tpu_custom_call.1} parent=1 // pred_check
      _
    $region47: #{tpu_custom_call.1} parent=1 // pred_check_branch
      %104 = sbr.rel (0) target = $region49
    $region48: #{tpu_custom_call.1} parent=1 // pred_region
      %105 = dma.done [#allocation6], 256
    $region49: #{tpu_custom_call.1} parent=1 // pred_fallthru
      _
    // Predicated region
    $region50: #{tpu_custom_call.1} parent=1 // pred_check
      _
    $region51: #{tpu_custom_call.1} parent=1 // pred_check_branch
      %107 = sbr.rel (0) target = $region53
    $region52: #{tpu_custom_call.1} parent=1 // pred_region
      %108 = dma.done [#allocation6], 256
    $region53: #{tpu_custom_call.1} parent=1 // pred_fallthru
      _
    // Predicated region
    $region54: #{tpu_custom_call.1} parent=1 // pred_check
      _
    $region55: #{tpu_custom_call.1} parent=1 // pred_check_branch
      %110 = sbr.rel (0) target = $region57
    $region56: #{tpu_custom_call.1} parent=1 // pred_region
      %111 = dma.done [#allocation9], 3072
    $region57: #{tpu_custom_call.1} parent=1 // pred_fallthru
      _
    // Predicated region
    $region58: #{tpu_custom_call.1} parent=1 // pred_check
      _
    $region59: #{tpu_custom_call.1} parent=1 // pred_check_branch
      %113 = sbr.rel (0) target = $region61
    $region60: #{tpu_custom_call.1} parent=1 // pred_region
      %114 = dma.done [#allocation9], 3072
    $region61: #{tpu_custom_call.1} parent=1 // pred_fallthru
      _
    // Predicated region
    $region62: #{tpu_custom_call.1} parent=1 // pred_check
      _
    $region63: #{tpu_custom_call.1} parent=1 // pred_check_branch
      %116 = sbr.rel (0) target = $region65
    $region64: #{tpu_custom_call.1} parent=1 // pred_region
      %117 = dma.done [#allocation12], 2048
    $region65: #{tpu_custom_call.1} parent=1 // pred_fallthru
      _
    %v119 = vld [vmem:[#allocation2] sm:$0xff]
    %v120 = vld [vmem:[#allocation2 + $0x8] sm:$0xff]
    %v121 = vld [vmem:[#allocation2 + $0x10] sm:$0xff]
    %v122 = vld [vmem:[#allocation2 + $0x18] sm:$0xff]
    %v123 = vpack.c.bf16 %v120, %v119
    %v124 = vpack.c.bf16 %v122, %v121
    %v125 = vld [vmem:[#allocation5] sm:$0xf]
    %v126 = vld [vmem:[#allocation5 + $0x4] sm:$0xf]
    %v127 = vld [vmem:[#allocation5 + $0x8] sm:$0xf]
    %v128 = vld [vmem:[#allocation5 + $0xc] sm:$0xf]
    %v129 = vld [vmem:[#allocation7] sm:$0xf]
    %v130 = vld [vmem:[#allocation7 + $0x4] sm:$0xf]
    %v131 = vld [vmem:[#allocation7 + $0x8] sm:$0xf]
    %v132 = vld [vmem:[#allocation7 + $0xc] sm:$0xf]
    %v133 = vld [vmem:[#allocation11] sm:$0xff]
    %v134 = vld [vmem:[#allocation11 + $0x8] sm:$0xff]
    %v135 = vld [vmem:[#allocation11 + $0x10] sm:$0xff]
    %v136 = vld [vmem:[#allocation11 + $0x18] sm:$0xff]
    %v137 = vld [vmem:[#allocation11 + $0x20] sm:$0xff]
    %v138 = vld [vmem:[#allocation11 + $0x28] sm:$0xff]
    %v139 = vld [vmem:[#allocation11 + $0x30] sm:$0xff]
    %v140 = vld [vmem:[#allocation11 + $0x38] sm:$0xff]
    %v141 = vld [vmem:[#allocation11 + $0x40] sm:$0xff]
    %v142 = vld [vmem:[#allocation11 + $0x48] sm:$0xff]
    %v143 = vld [vmem:[#allocation11 + $0x50] sm:$0xff]
    %v144 = vld [vmem:[#allocation11 + $0x58] sm:$0xff]
    %v145 = vld [vmem:[#allocation11 + $0x60] sm:$0xff]
    %v146 = vld [vmem:[#allocation11 + $0x68] sm:$0xff]
    %v147 = vld [vmem:[#allocation11 + $0x70] sm:$0xff]
    %v148 = vld [vmem:[#allocation11 + $0x78] sm:$0xff]
    %v153 = vunpack.c.l.b16 %v125
    %v154 = vunpack.c.l.b16 %v126
    %v155 = vunpack.c.l.b16 %v127
    %v156 = vunpack.c.l.b16 %v128
    %v157 = vpack.c.b16 %v154, %v153
    %v158 = vpack.c.b16 %v156, %v155
    %vm159 = vcmask 261120
    %v161 = vsel %vm159, %v157, 0
    %v164 = vsel %vm159, %v158, 0
    %166 = vmatprep.subr.bf16.mxu0 0
    %167 = vmatpush1.bf16.msra.mxu0 %v123
    %168 = vmatprep.subr.bf16.mxu0 0
    %169 = vmatpush1.bf16.msra.mxu0 %v124
    %170 = vmatprep.subr.bf16.mxu0 0
    %171 = vmatpush1.bf16.msra.mxu0 0
    %172 = vmatprep.subr.bf16.mxu0 0
    %173 = vmatpush1.bf16.msra.mxu0 0
    %174 = vmatprep.subr.bf16.mxu0 0
    %175 = vmatpush1.bf16.msra.mxu0 0
    %176 = vmatprep.subr.bf16.mxu0 0
    %177 = vmatpush1.bf16.msra.mxu0 0
    %178 = vmatprep.subr.bf16.mxu0 0
    %179 = vmatpush1.bf16.msra.mxu0 0
    %180 = vmatprep.subr.bf16.mxu0 0
    %181 = vmatpush1.bf16.msra.mxu0 0
    %182 = vmatprep.subr.bf16.mxu0 0
    %183 = vmatpush1.bf16.msra.mxu0 0
    %184 = vmatprep.subr.bf16.mxu0 0
    %185 = vmatpush1.bf16.msra.mxu0 0
    %186 = vmatprep.subr.bf16.mxu0 0
    %187 = vmatpush1.bf16.msra.mxu0 0
    %188 = vmatprep.subr.bf16.mxu0 0
    %189 = vmatpush1.bf16.msra.mxu0 0
    %190 = vmatprep.subr.bf16.mxu0 0
    %191 = vmatpush1.bf16.msra.mxu0 0
    %192 = vmatprep.subr.bf16.mxu0 0
    %193 = vmatpush1.bf16.msra.mxu0 0
    %194 = vmatprep.subr.bf16.mxu0 0
    %195 = vmatpush1.bf16.msra.mxu0 0
    %196 = vmatprep.subr.bf16.mxu0 0
    %197 = vmatpush1.bf16.msra.mxu0 0
    %198 = vmatprep.mubr.bf16.mxu0 0
    %199 = vmatmul.mubr.bf16.gmra.mrb[0].mxu0 %v161
    %v200 = vpop.f32.mrb[0].mxu0
    %v201 = vadd.f32 0.0, %v200
    %v202 = vpop.f32.mrb[0].mxu0
    %v203 = vpop.f32.mrb[0].mxu0
    %v204 = vadd.f32 0.0, %v203
    %v205 = vpop.f32.mrb[0].mxu0
    %206 = vmatprep.mubr.bf16.mxu0 0
    %207 = vmatmul.mubr.bf16.gmra.mrb[0].mxu0 %v164
    %v208 = vpop.f32.mrb[0].mxu0
    %v209 = vadd.f32 0.0, %v208
    %v210 = vpop.f32.mrb[0].mxu0
    %v211 = vpop.f32.mrb[0].mxu0
    %v212 = vadd.f32 0.0, %v211
    %v213 = vpop.f32.mrb[0].mxu0
    %214 = vdwg.mxu0
    %v215 = vpack.c.bf16 %v204, %v201
    %v216 = vpack.c.bf16 %v212, %v209
    %v221 = vunpack.c.l.b16 %v129
    %v222 = vunpack.c.l.b16 %v130
    %v223 = vunpack.c.l.b16 %v131
    %v224 = vunpack.c.l.b16 %v132
    %v225 = vpack.c.b16 %v222, %v221
    %v226 = vpack.c.b16 %v224, %v223
    %v228 = vsel %vm159, %v225, 0
    %v231 = vsel %vm159, %v226, 0
    %233 = vmatprep.subr.bf16.mxu0 0
    %234 = vmatpush1.bf16.msra.mxu0 %v123
    %235 = vmatprep.subr.bf16.mxu0 0
    %236 = vmatpush1.bf16.msra.mxu0 %v124
    %237 = vmatprep.subr.bf16.mxu0 0
    %238 = vmatpush1.bf16.msra.mxu0 0
    %239 = vmatprep.subr.bf16.mxu0 0
    %240 = vmatpush1.bf16.msra.mxu0 0
    %241 = vmatprep.subr.bf16.mxu0 0
    %242 = vmatpush1.bf16.msra.mxu0 0
    %243 = vmatprep.subr.bf16.mxu0 0
    %244 = vmatpush1.bf16.msra.mxu0 0
    %245 = vmatprep.subr.bf16.mxu0 0
    %246 = vmatpush1.bf16.msra.mxu0 0
    %247 = vmatprep.subr.bf16.mxu0 0
    %248 = vmatpush1.bf16.msra.mxu0 0
    %249 = vmatprep.subr.bf16.mxu0 0
    %250 = vmatpush1.bf16.msra.mxu0 0
    %251 = vmatprep.subr.bf16.mxu0 0
    %252 = vmatpush1.bf16.msra.mxu0 0
    %253 = vmatprep.subr.bf16.mxu0 0
    %254 = vmatpush1.bf16.msra.mxu0 0
    %255 = vmatprep.subr.bf16.mxu0 0
    %256 = vmatpush1.bf16.msra.mxu0 0
    %257 = vmatprep.subr.bf16.mxu0 0
    %258 = vmatpush1.bf16.msra.mxu0 0
    %259 = vmatprep.subr.bf16.mxu0 0
    %260 = vmatpush1.bf16.msra.mxu0 0
    %261 = vmatprep.subr.bf16.mxu0 0
    %262 = vmatpush1.bf16.msra.mxu0 0
    %263 = vmatprep.subr.bf16.mxu0 0
    %264 = vmatpush1.bf16.msra.mxu0 0
    %265 = vmatprep.mubr.bf16.mxu0 0
    %266 = vmatmul.mubr.bf16.gmra.mrb[0].mxu0 %v228
    %v267 = vpop.f32.mrb[0].mxu0
    %v268 = vadd.f32 0.0, %v267
    %v269 = vpop.f32.mrb[0].mxu0
    %v270 = vpop.f32.mrb[0].mxu0
    %v271 = vadd.f32 0.0, %v270
    %v272 = vpop.f32.mrb[0].mxu0
    %273 = vmatprep.mubr.bf16.mxu0 0
    %274 = vmatmul.mubr.bf16.gmra.mrb[0].mxu0 %v231
    %v275 = vpop.f32.mrb[0].mxu0
    %v276 = vadd.f32 0.0, %v275
    %v277 = vpop.f32.mrb[0].mxu0
    %v278 = vpop.f32.mrb[0].mxu0
    %v279 = vadd.f32 0.0, %v278
    %v280 = vpop.f32.mrb[0].mxu0
    %281 = vdwg.mxu0
    %v282 = vpack.c.bf16 %v271, %v268
    %v283 = vpack.c.bf16 %v279, %v276
    %s284 = scalar_lea.vmem [#allocation8], 64
    %v285 = vld [vmem:[%s284] sm:$0xf]
    %v286 = vld [vmem:[%s284 + $0x4] sm:$0xf]
    %v287 = vld [vmem:[%s284 + $0x8] sm:$0xf]
    %v288 = vld [vmem:[%s284 + $0xc] sm:$0xf]
    %v289 = vld [vmem:[%s284 + $0x10] sm:$0xf]
    %v290 = vld [vmem:[%s284 + $0x14] sm:$0xf]
    %v291 = vld [vmem:[%s284 + $0x18] sm:$0xf]
    %v292 = vld [vmem:[%s284 + $0x1c] sm:$0xf]
    %v293 = vld [vmem:[%s284 + $0x20] sm:$0xf]
    %v294 = vld [vmem:[%s284 + $0x24] sm:$0xf]
    %v295 = vld [vmem:[%s284 + $0x28] sm:$0xf]
    %v296 = vld [vmem:[%s284 + $0x2c] sm:$0xf]
    %v297 = vld [vmem:[%s284 + $0x30] sm:$0xf]
    %v298 = vld [vmem:[%s284 + $0x34] sm:$0xf]
    %v299 = vld [vmem:[%s284 + $0x38] sm:$0xf]
    %v300 = vld [vmem:[%s284 + $0x3c] sm:$0xf]
    %v301 = vld [vmem:[#allocation8] sm:$0xf]
    %v302 = vld [vmem:[#allocation8 + $0x4] sm:$0xf]
    %v303 = vld [vmem:[#allocation8 + $0x8] sm:$0xf]
    %v304 = vld [vmem:[#allocation8 + $0xc] sm:$0xf]
    %v305 = vld [vmem:[#allocation8 + $0x10] sm:$0xf]
    %v306 = vld [vmem:[#allocation8 + $0x14] sm:$0xf]
    %v307 = vld [vmem:[#allocation8 + $0x18] sm:$0xf]
    %v308 = vld [vmem:[#allocation8 + $0x1c] sm:$0xf]
    %v309 = vld [vmem:[#allocation8 + $0x20] sm:$0xf]
    %v310 = vld [vmem:[#allocation8 + $0x24] sm:$0xf]
    %v311 = vld [vmem:[#allocation8 + $0x28] sm:$0xf]
    %v312 = vld [vmem:[#allocation8 + $0x2c] sm:$0xf]
    %v313 = vld [vmem:[#allocation8 + $0x30] sm:$0xf]
    %v314 = vld [vmem:[#allocation8 + $0x34] sm:$0xf]
    %v315 = vld [vmem:[#allocation8 + $0x38] sm:$0xf]
    %v316 = vld [vmem:[#allocation8 + $0x3c] sm:$0xf]
    %v333 = vunpack.c.l.b16 %v301
    %v334 = vunpack.c.l.b16 %v302
    %v335 = vunpack.c.l.b16 %v303
    %v336 = vunpack.c.l.b16 %v304
    %v337 = vunpack.c.l.b16 %v305
    %v338 = vunpack.c.l.b16 %v306
    %v339 = vunpack.c.l.b16 %v307
    %v340 = vunpack.c.l.b16 %v308
    %v341 = vunpack.c.l.b16 %v309
    %v342 = vunpack.c.l.b16 %v310
    %v343 = vunpack.c.l.b16 %v311
    %v344 = vunpack.c.l.b16 %v312
    %v345 = vunpack.c.l.b16 %v313
    %v346 = vunpack.c.l.b16 %v314
    %v347 = vunpack.c.l.b16 %v315
    %v348 = vunpack.c.l.b16 %v316
    %v349 = vpack.c.b16 %v334, %v333
    %v350 = vpack.c.b16 %v336, %v335
    %v351 = vpack.c.b16 %v338, %v337
    %v352 = vpack.c.b16 %v340, %v339
    %v353 = vpack.c.b16 %v342, %v341
    %v354 = vpack.c.b16 %v344, %v343
    %v355 = vpack.c.b16 %v346, %v345
    %v356 = vpack.c.b16 %v348, %v347
    %365 = vmatprep.subr.bf16.mxu0 0
    %366 = vmatpush1.bf16.msra.mxu0 %v349
    %367 = vmatprep.subr.bf16.mxu0 0
    %368 = vmatpush1.bf16.msra.mxu0 %v350
    %369 = vmatprep.subr.bf16.mxu0 0
    %370 = vmatpush1.bf16.msra.mxu0 %v351
    %371 = vmatprep.subr.bf16.mxu0 0
    %372 = vmatpush1.bf16.msra.mxu0 %v352
    %373 = vmatprep.subr.bf16.mxu0 0
    %374 = vmatpush1.bf16.msra.mxu0 %v353
    %375 = vmatprep.subr.bf16.mxu0 0
    %376 = vmatpush1.bf16.msra.mxu0 %v354
    %377 = vmatprep.subr.bf16.mxu0 0
    %378 = vmatpush1.bf16.msra.mxu0 %v355
    %379 = vmatprep.subr.bf16.mxu0 0
    %380 = vmatpush1.bf16.msra.mxu0 %v356
    %381 = vmatprep.subr.bf16.mxu0 0
    %382 = vmatpush1.bf16.msra.mxu0 0
    %383 = vmatprep.subr.bf16.mxu0 0
    %384 = vmatpush1.bf16.msra.mxu0 0
    %385 = vmatprep.subr.bf16.mxu0 0
    %386 = vmatpush1.bf16.msra.mxu0 0
    %387 = vmatprep.subr.bf16.mxu0 0
    %388 = vmatpush1.bf16.msra.mxu0 0
    %389 = vmatprep.subr.bf16.mxu0 0
    %390 = vmatpush1.bf16.msra.mxu0 0
    %391 = vmatprep.subr.bf16.mxu0 0
    %392 = vmatpush1.bf16.msra.mxu0 0
    %393 = vmatprep.subr.bf16.mxu0 0
    %394 = vmatpush1.bf16.msra.mxu0 0
    %395 = vmatprep.subr.bf16.mxu0 0
    %396 = vmatpush1.bf16.msra.mxu0 0
    %397 = vmatprep.mubr.bf16.mxu0 0
    %398 = vmatmul.mubr.bf16.gmra.mrb[0].mxu0 %v215
    %v399 = vpop.f32.mrb[0].mxu0
    %v400 = vadd.f32 0.0, %v399
    %v401 = vpop.f32.mrb[0].mxu0
    %v402 = vpop.f32.mrb[0].mxu0
    %v403 = vadd.f32 0.0, %v402
    %v404 = vpop.f32.mrb[0].mxu0
    %405 = vmatprep.mubr.bf16.mxu0 0
    %406 = vmatmul.mubr.bf16.gmra.mrb[0].mxu0 %v216
    %v407 = vpop.f32.mrb[0].mxu0
    %v408 = vadd.f32 0.0, %v407
    %v409 = vpop.f32.mrb[0].mxu0
    %v410 = vpop.f32.mrb[0].mxu0
    %v411 = vadd.f32 0.0, %v410
    %v412 = vpop.f32.mrb[0].mxu0
    %413 = vdwg.mxu0
    %v430 = vunpack.c.l.b16 %v285
    %v431 = vunpack.c.l.b16 %v286
    %v432 = vunpack.c.l.b16 %v287
    %v433 = vunpack.c.l.b16 %v288
    %v434 = vunpack.c.l.b16 %v289
    %v435 = vunpack.c.l.b16 %v290
    %v436 = vunpack.c.l.b16 %v291
    %v437 = vunpack.c.l.b16 %v292
    %v438 = vunpack.c.l.b16 %v293
    %v439 = vunpack.c.l.b16 %v294
    %v440 = vunpack.c.l.b16 %v295
    %v441 = vunpack.c.l.b16 %v296
    %v442 = vunpack.c.l.b16 %v297
    %v443 = vunpack.c.l.b16 %v298
    %v444 = vunpack.c.l.b16 %v299
    %v445 = vunpack.c.l.b16 %v300
    %v446 = vpack.c.b16 %v431, %v430
    %v447 = vpack.c.b16 %v433, %v432
    %v448 = vpack.c.b16 %v435, %v434
    %v449 = vpack.c.b16 %v437, %v436
    %v450 = vpack.c.b16 %v439, %v438
    %v451 = vpack.c.b16 %v441, %v440
    %v452 = vpack.c.b16 %v443, %v442
    %v453 = vpack.c.b16 %v445, %v444
    %462 = vmatprep.subr.bf16.mxu0 0
    %463 = vmatpush1.bf16.msra.mxu0 %v446
    %464 = vmatprep.subr.bf16.mxu0 0
    %465 = vmatpush1.bf16.msra.mxu0 %v447
    %466 = vmatprep.subr.bf16.mxu0 0
    %467 = vmatpush1.bf16.msra.mxu0 %v448
    %468 = vmatprep.subr.bf16.mxu0 0
    %469 = vmatpush1.bf16.msra.mxu0 %v449
    %470 = vmatprep.subr.bf16.mxu0 0
    %471 = vmatpush1.bf16.msra.mxu0 %v450
    %472 = vmatprep.subr.bf16.mxu0 0
    %473 = vmatpush1.bf16.msra.mxu0 %v451
    %474 = vmatprep.subr.bf16.mxu0 0
    %475 = vmatpush1.bf16.msra.mxu0 %v452
    %476 = vmatprep.subr.bf16.mxu0 0
    %477 = vmatpush1.bf16.msra.mxu0 %v453
    %478 = vmatprep.subr.bf16.mxu0 0
    %479 = vmatpush1.bf16.msra.mxu0 0
    %480 = vmatprep.subr.bf16.mxu0 0
    %481 = vmatpush1.bf16.msra.mxu0 0
    %482 = vmatprep.subr.bf16.mxu0 0
    %483 = vmatpush1.bf16.msra.mxu0 0
    %484 = vmatprep.subr.bf16.mxu0 0
    %485 = vmatpush1.bf16.msra.mxu0 0
    %486 = vmatprep.subr.bf16.mxu0 0
    %487 = vmatpush1.bf16.msra.mxu0 0
    %488 = vmatprep.subr.bf16.mxu0 0
    %489 = vmatpush1.bf16.msra.mxu0 0
    %490 = vmatprep.subr.bf16.mxu0 0
    %491 = vmatpush1.bf16.msra.mxu0 0
    %492 = vmatprep.subr.bf16.mxu0 0
    %493 = vmatpush1.bf16.msra.mxu0 0
    %494 = vmatprep.mubr.bf16.mxu0 0
    %495 = vmatmul.mubr.bf16.gmra.mrb[0].mxu0 %v123
    %v496 = vpop.f32.mrb[0].mxu0
    %v497 = vadd.f32 %v400, %v496
    %v498 = vpop.f32.mrb[0].mxu0
    %v499 = vpop.f32.mrb[0].mxu0
    %v500 = vadd.f32 %v403, %v499
    %v501 = vpop.f32.mrb[0].mxu0
    %502 = vmatprep.mubr.bf16.mxu0 0
    %503 = vmatmul.mubr.bf16.gmra.mrb[0].mxu0 %v124
    %v504 = vpop.f32.mrb[0].mxu0
    %v505 = vadd.f32 %v408, %v504
    %v506 = vpop.f32.mrb[0].mxu0
    %v507 = vpop.f32.mrb[0].mxu0
    %v508 = vadd.f32 %v411, %v507
    %v509 = vpop.f32.mrb[0].mxu0
    %510 = vdwg.mxu0
    %s511 = scalar_lea.vmem [#allocation8], 128
    %v512 = vld [vmem:[%s511] sm:$0xf]
    %v513 = vld [vmem:[%s511 + $0x4] sm:$0xf]
    %v514 = vld [vmem:[%s511 + $0x8] sm:$0xf]
    %v515 = vld [vmem:[%s511 + $0xc] sm:$0xf]
    %v516 = vld [vmem:[%s511 + $0x10] sm:$0xf]
    %v517 = vld [vmem:[%s511 + $0x14] sm:$0xf]
    %v518 = vld [vmem:[%s511 + $0x18] sm:$0xf]
    %v519 = vld [vmem:[%s511 + $0x1c] sm:$0xf]
    %v520 = vld [vmem:[%s511 + $0x20] sm:$0xf]
    %v521 = vld [vmem:[%s511 + $0x24] sm:$0xf]
    %v522 = vld [vmem:[%s511 + $0x28] sm:$0xf]
    %v523 = vld [vmem:[%s511 + $0x2c] sm:$0xf]
    %v524 = vld [vmem:[%s511 + $0x30] sm:$0xf]
    %v525 = vld [vmem:[%s511 + $0x34] sm:$0xf]
    %v526 = vld [vmem:[%s511 + $0x38] sm:$0xf]
    %v527 = vld [vmem:[%s511 + $0x3c] sm:$0xf]
    %v544 = vunpack.c.l.b16 %v512
    %v545 = vunpack.c.l.b16 %v513
    %v546 = vunpack.c.l.b16 %v514
    %v547 = vunpack.c.l.b16 %v515
    %v548 = vunpack.c.l.b16 %v516
    %v549 = vunpack.c.l.b16 %v517
    %v550 = vunpack.c.l.b16 %v518
    %v551 = vunpack.c.l.b16 %v519
    %v552 = vunpack.c.l.b16 %v520
    %v553 = vunpack.c.l.b16 %v521
    %v554 = vunpack.c.l.b16 %v522
    %v555 = vunpack.c.l.b16 %v523
    %v556 = vunpack.c.l.b16 %v524
    %v557 = vunpack.c.l.b16 %v525
    %v558 = vunpack.c.l.b16 %v526
    %v559 = vunpack.c.l.b16 %v527
    %v560 = vpack.c.b16 %v545, %v544
    %v561 = vpack.c.b16 %v547, %v546
    %v562 = vpack.c.b16 %v549, %v548
    %v563 = vpack.c.b16 %v551, %v550
    %v564 = vpack.c.b16 %v553, %v552
    %v565 = vpack.c.b16 %v555, %v554
    %v566 = vpack.c.b16 %v557, %v556
    %v567 = vpack.c.b16 %v559, %v558
    %576 = vmatprep.subr.bf16.mxu0 0
    %577 = vmatpush1.bf16.msra.mxu0 %v560
    %578 = vmatprep.subr.bf16.mxu0 0
    %579 = vmatpush1.bf16.msra.mxu0 %v561
    %580 = vmatprep.subr.bf16.mxu0 0
    %581 = vmatpush1.bf16.msra.mxu0 %v562
    %582 = vmatprep.subr.bf16.mxu0 0
    %583 = vmatpush1.bf16.msra.mxu0 %v563
    %584 = vmatprep.subr.bf16.mxu0 0
    %585 = vmatpush1.bf16.msra.mxu0 %v564
    %586 = vmatprep.subr.bf16.mxu0 0
    %587 = vmatpush1.bf16.msra.mxu0 %v565
    %588 = vmatprep.subr.bf16.mxu0 0
    %589 = vmatpush1.bf16.msra.mxu0 %v566
    %590 = vmatprep.subr.bf16.mxu0 0
    %591 = vmatpush1.bf16.msra.mxu0 %v567
    %592 = vmatprep.subr.bf16.mxu0 0
    %593 = vmatpush1.bf16.msra.mxu0 0
    %594 = vmatprep.subr.bf16.mxu0 0
    %595 = vmatpush1.bf16.msra.mxu0 0
    %596 = vmatprep.subr.bf16.mxu0 0
    %597 = vmatpush1.bf16.msra.mxu0 0
    %598 = vmatprep.subr.bf16.mxu0 0
    %599 = vmatpush1.bf16.msra.mxu0 0
    %600 = vmatprep.subr.bf16.mxu0 0
    %601 = vmatpush1.bf16.msra.mxu0 0
    %602 = vmatprep.subr.bf16.mxu0 0
    %603 = vmatpush1.bf16.msra.mxu0 0
    %604 = vmatprep.subr.bf16.mxu0 0
    %605 = vmatpush1.bf16.msra.mxu0 0
    %606 = vmatprep.subr.bf16.mxu0 0
    %607 = vmatpush1.bf16.msra.mxu0 0
    %608 = vmatprep.mubr.bf16.mxu0 0
    %609 = vmatmul.mubr.bf16.gmra.mrb[0].mxu0 %v282
    %v610 = vpop.f32.mrb[0].mxu0
    %v611 = vadd.f32 0.0, %v610
    %v612 = vpop.f32.mrb[0].mxu0
    %v613 = vpop.f32.mrb[0].mxu0
    %v614 = vadd.f32 0.0, %v613
    %v615 = vpop.f32.mrb[0].mxu0
    %616 = vmatprep.mubr.bf16.mxu0 0
    %617 = vmatmul.mubr.bf16.gmra.mrb[0].mxu0 %v283
    %v618 = vpop.f32.mrb[0].mxu0
    %v619 = vadd.f32 0.0, %v618
    %v620 = vpop.f32.mrb[0].mxu0
    %v621 = vpop.f32.mrb[0].mxu0
    %v622 = vadd.f32 0.0, %v621
    %v623 = vpop.f32.mrb[0].mxu0
    %624 = vdwg.mxu0
    %v625 = vadd.f32 %v497, %v611
    %v626 = vadd.f32 %v500, %v614
    %v627 = vadd.f32 %v505, %v619
    %v628 = vadd.f32 %v508, %v622
    %629 = vmatprep.subr.mxu0 0.0
    %630 = vmatpush1.msra.mxu0 %v133
    %631 = vmatprep.subr.mxu0 0.0
    %632 = vmatpush1.msra.mxu0 %v134
    %633 = vmatprep.subr.mxu0 0.0
    %634 = vmatpush1.msra.mxu0 %v135
    %635 = vmatprep.subr.mxu0 0.0
    %636 = vmatpush1.msra.mxu0 %v136
    %637 = vmatprep.subr.mxu0 0.0
    %638 = vmatpush1.msra.mxu0 %v137
    %639 = vmatprep.subr.mxu0 0.0
    %640 = vmatpush1.msra.mxu0 %v138
    %641 = vmatprep.subr.mxu0 0.0
    %642 = vmatpush1.msra.mxu0 %v139
    %643 = vmatprep.subr.mxu0 0.0
    %644 = vmatpush1.msra.mxu0 %v140
    %645 = vmatprep.subr.mxu0 0.0
    %646 = vmatpush1.msra.mxu0 %v141
    %647 = vmatprep.subr.mxu0 0.0
    %648 = vmatpush1.msra.mxu0 %v142
    %649 = vmatprep.subr.mxu0 0.0
    %650 = vmatpush1.msra.mxu0 %v143
    %651 = vmatprep.subr.mxu0 0.0
    %652 = vmatpush1.msra.mxu0 %v144
    %653 = vmatprep.subr.mxu0 0.0
    %654 = vmatpush1.msra.mxu0 %v145
    %655 = vmatprep.subr.mxu0 0.0
    %656 = vmatpush1.msra.mxu0 %v146
    %657 = vmatprep.subr.mxu0 0.0
    %658 = vmatpush1.msra.mxu0 %v147
    %659 = vmatprep.subr.mxu0 0.0
    %660 = vmatpush1.msra.mxu0 %v148
    %661 = vmatprep.subr.mxu0 0.0
    %662 = vmatpush1.msra.mxu0 0.0
    %663 = vmatprep.subr.mxu0 0.0
    %664 = vmatpush1.msra.mxu0 0.0
    %665 = vmatprep.subr.mxu0 0.0
    %666 = vmatpush1.msra.mxu0 0.0
    %667 = vmatprep.subr.mxu0 0.0
    %668 = vmatpush1.msra.mxu0 0.0
    %669 = vmatprep.subr.mxu0 0.0
    %670 = vmatpush1.msra.mxu0 0.0
    %671 = vmatprep.subr.mxu0 0.0
    %672 = vmatpush1.msra.mxu0 0.0
    %673 = vmatprep.subr.mxu0 0.0
    %674 = vmatpush1.msra.mxu0 0.0
    %675 = vmatprep.subr.mxu0 0.0
    %676 = vmatpush1.msra.mxu0 0.0
    %677 = vmatprep.subr.mxu0 0.0
    %678 = vmatpush1.msra.mxu0 0.0
    %679 = vmatprep.subr.mxu0 0.0
    %680 = vmatpush1.msra.mxu0 0.0
    %681 = vmatprep.subr.mxu0 0.0
    %682 = vmatpush1.msra.mxu0 0.0
    %683 = vmatprep.subr.mxu0 0.0
    %684 = vmatpush1.msra.mxu0 0.0
    %685 = vmatprep.subr.mxu0 0.0
    %686 = vmatpush1.msra.mxu0 0.0
    %687 = vmatprep.subr.mxu0 0.0
    %688 = vmatpush1.msra.mxu0 0.0
    %689 = vmatprep.subr.mxu0 0.0
    %690 = vmatpush1.msra.mxu0 0.0
    %691 = vmatprep.subr.mxu0 0.0
    %692 = vmatpush1.msra.mxu0 0.0
    %693 = vmatprep.mubr.f32.mxu0 0.0
    %694 = vmatmul.mubr.f32.gmra.mrb[0].mxu0 %v625
    %v695 = vpop.f32.mrb[0].mxu0
    %v696 = vadd.f32 0.0, %v695
    %v697 = vpop.f32.mrb[0].mxu0
    %698 = vmatprep.mubr.f32.mxu0 0.0
    %699 = vmatmul.mubr.f32.gmra.mrb[0].mxu0 %v626
    %v700 = vpop.f32.mrb[0].mxu0
    %v701 = vadd.f32 0.0, %v700
    %v702 = vpop.f32.mrb[0].mxu0
    %703 = vmatprep.mubr.f32.mxu0 0.0
    %704 = vmatmul.mubr.f32.gmra.mrb[0].mxu0 %v627
    %v705 = vpop.f32.mrb[0].mxu0
    %v706 = vadd.f32 0.0, %v705
    %v707 = vpop.f32.mrb[0].mxu0
    %708 = vmatprep.mubr.f32.mxu0 0.0
    %709 = vmatmul.mubr.f32.gmra.mrb[0].mxu0 %v628
    %v710 = vpop.f32.mrb[0].mxu0
    %v711 = vadd.f32 0.0, %v710
    %v712 = vpop.f32.mrb[0].mxu0
    %713 = vdwg.mxu0
    %v714 = vadd.f32 %v696, %v701
    %v715 = vadd.f32 %v714, %v706
    %v716 = vadd.f32 %v715, %v711
    %v717 = vrot.slane %v716, 4
    %v718 = vadd.f32 %v716, %v717
    %v719 = vrot.slane %v718, 2
    %v720 = vadd.f32 %v718, %v719
    %v721 = vrot.slane %v720, 1
    %v722 = vadd.f32 %v720, %v721
    %v723 = vmul.f32 %v625, %v625
    %v724 = vmul.f32 %v626, %v626
    %v725 = vmul.f32 %v627, %v627
    %v726 = vmul.f32 %v628, %v628
    %727 = vmatprep.subr.mxu0 0.0
    %728 = vmatpush1.msra.mxu0 %v133
    %729 = vmatprep.subr.mxu0 0.0
    %730 = vmatpush1.msra.mxu0 %v134
    %731 = vmatprep.subr.mxu0 0.0
    %732 = vmatpush1.msra.mxu0 %v135
    %733 = vmatprep.subr.mxu0 0.0
    %734 = vmatpush1.msra.mxu0 %v136
    %735 = vmatprep.subr.mxu0 0.0
    %736 = vmatpush1.msra.mxu0 %v137
    %737 = vmatprep.subr.mxu0 0.0
    %738 = vmatpush1.msra.mxu0 %v138
    %739 = vmatprep.subr.mxu0 0.0
    %740 = vmatpush1.msra.mxu0 %v139
    %741 = vmatprep.subr.mxu0 0.0
    %742 = vmatpush1.msra.mxu0 %v140
    %743 = vmatprep.subr.mxu0 0.0
    %744 = vmatpush1.msra.mxu0 %v141
    %745 = vmatprep.subr.mxu0 0.0
    %746 = vmatpush1.msra.mxu0 %v142
    %747 = vmatprep.subr.mxu0 0.0
    %748 = vmatpush1.msra.mxu0 %v143
    %749 = vmatprep.subr.mxu0 0.0
    %750 = vmatpush1.msra.mxu0 %v144
    %751 = vmatprep.subr.mxu0 0.0
    %752 = vmatpush1.msra.mxu0 %v145
    %753 = vmatprep.subr.mxu0 0.0
    %754 = vmatpush1.msra.mxu0 %v146
    %755 = vmatprep.subr.mxu0 0.0
    %756 = vmatpush1.msra.mxu0 %v147
    %757 = vmatprep.subr.mxu0 0.0
    %758 = vmatpush1.msra.mxu0 %v148
    %759 = vmatprep.subr.mxu0 0.0
    %760 = vmatpush1.msra.mxu0 0.0
    %761 = vmatprep.subr.mxu0 0.0
    %762 = vmatpush1.msra.mxu0 0.0
    %763 = vmatprep.subr.mxu0 0.0
    %764 = vmatpush1.msra.mxu0 0.0
    %765 = vmatprep.subr.mxu0 0.0
    %766 = vmatpush1.msra.mxu0 0.0
    %767 = vmatprep.subr.mxu0 0.0
    %768 = vmatpush1.msra.mxu0 0.0
    %769 = vmatprep.subr.mxu0 0.0
    %770 = vmatpush1.msra.mxu0 0.0
    %771 = vmatprep.subr.mxu0 0.0
    %772 = vmatpush1.msra.mxu0 0.0
    %773 = vmatprep.subr.mxu0 0.0
    %774 = vmatpush1.msra.mxu0 0.0
    %775 = vmatprep.subr.mxu0 0.0
    %776 = vmatpush1.msra.mxu0 0.0
    %777 = vmatprep.subr.mxu0 0.0
    %778 = vmatpush1.msra.mxu0 0.0
    %779 = vmatprep.subr.mxu0 0.0
    %780 = vmatpush1.msra.mxu0 0.0
    %781 = vmatprep.subr.mxu0 0.0
    %782 = vmatpush1.msra.mxu0 0.0
    %783 = vmatprep.subr.mxu0 0.0
    %784 = vmatpush1.msra.mxu0 0.0
    %785 = vmatprep.subr.mxu0 0.0
    %786 = vmatpush1.msra.mxu0 0.0
    %787 = vmatprep.subr.mxu0 0.0
    %788 = vmatpush1.msra.mxu0 0.0
    %789 = vmatprep.subr.mxu0 0.0
    %790 = vmatpush1.msra.mxu0 0.0
    %791 = vmatprep.mubr.f32.mxu0 0.0
    %792 = vmatmul.mubr.f32.gmra.mrb[0].mxu0 %v723
    %v793 = vpop.f32.mrb[0].mxu0
    %v794 = vadd.f32 0.0, %v793
    %v795 = vpop.f32.mrb[0].mxu0
    %796 = vmatprep.mubr.f32.mxu0 0.0
    %797 = vmatmul.mubr.f32.gmra.mrb[0].mxu0 %v724
    %v798 = vpop.f32.mrb[0].mxu0
    %v799 = vadd.f32 0.0, %v798
    %v800 = vpop.f32.mrb[0].mxu0
    %801 = vmatprep.mubr.f32.mxu0 0.0
    %802 = vmatmul.mubr.f32.gmra.mrb[0].mxu0 %v725
    %v803 = vpop.f32.mrb[0].mxu0
    %v804 = vadd.f32 0.0, %v803
    %v805 = vpop.f32.mrb[0].mxu0
    %806 = vmatprep.mubr.f32.mxu0 0.0
    %807 = vmatmul.mubr.f32.gmra.mrb[0].mxu0 %v726
    %v808 = vpop.f32.mrb[0].mxu0
    %v809 = vadd.f32 0.0, %v808
    %v810 = vpop.f32.mrb[0].mxu0
    %811 = vdwg.mxu0
    %v812 = vadd.f32 %v794, %v799
    %v813 = vadd.f32 %v812, %v804
    %v814 = vadd.f32 %v813, %v809
    %v815 = vrot.slane %v814, 4
    %v816 = vadd.f32 %v814, %v815
    %v817 = vrot.slane %v816, 2
    %v818 = vadd.f32 %v816, %v817
    %v819 = vrot.slane %v818, 1
    %v820 = vadd.f32 %v818, %v819
    %v821 = vmul.f32 %v722, %v722
    %v822 = vsub.f32 %v820, %v821
    %v823 = vmax.f32 %v822, 0.0
    %v824 = vadd.f32 %v823, 1e-05
    %v825 = vrsqrt.pop %v824
    %v826 = vsub.f32 %v625, %v722
    %v827 = vsub.f32 %v626, %v722
    %v828 = vsub.f32 %v627, %v722
    %v829 = vsub.f32 %v628, %v722
    %v830 = vld [vmem:[%s6] sm:$0x1]
    %v831 = vmul.f32 %v825, %v830
    %v832 = vlaneseq
    %v833 = vshrl.u32 %v832, 7
    %v834 = vsub.s32 0, %v833
    %v835 = vrot.slane %v831, %v834
    %v836 = vmul.f32 %v826, %v835
    %v837 = vmul.f32 %v827, %v835
    %v838 = vmul.f32 %v828, %v835
    %v839 = vmul.f32 %v829, %v835
    %v840 = vld [vmem:[%s7] sm:$0x1]
    %v842 = vlaneseq
    %v843 = vshrl.u32 %v842, 7
    %v844 = vsub.s32 0, %v843
    %v845 = vrot.slane %v840, %v844
    %v847 = vadd.f32 %v836, %v845
    %v848 = vadd.f32 %v837, %v845
    %v849 = vadd.f32 %v838, %v845
    %v850 = vadd.f32 %v839, %v845
    %v851 = vmax.f32 %v847, 0.0
    %v852 = vmax.f32 %v848, 0.0
    %v853 = vmax.f32 %v849, 0.0
    %v854 = vmax.f32 %v850, 0.0
    %v855 = vpack.c.bf16 %v852, %v851
    %v856 = vpack.c.bf16 %v854, %v853
    %857 = vmatprep.subr.bf16.mxu0 0
    %858 = vmatpush1.bf16.msra.mxu0 %v855
    %859 = vmatprep.subr.bf16.mxu0 0
    %860 = vmatpush1.bf16.msra.mxu0 %v856
    %861 = vmatprep.subr.bf16.mxu0 0
    %862 = vmatpush1.bf16.msra.mxu0 0
    %863 = vmatprep.subr.bf16.mxu0 0
    %864 = vmatpush1.bf16.msra.mxu0 0
    %865 = vmatprep.subr.bf16.mxu0 0
    %866 = vmatpush1.bf16.msra.mxu0 0
    %867 = vmatprep.subr.bf16.mxu0 0
    %868 = vmatpush1.bf16.msra.mxu0 0
    %869 = vmatprep.subr.bf16.mxu0 0
    %870 = vmatpush1.bf16.msra.mxu0 0
    %871 = vmatprep.subr.bf16.mxu0 0
    %872 = vmatpush1.bf16.msra.mxu0 0
    %873 = vmatprep.subr.bf16.mxu0 0
    %874 = vmatpush1.bf16.msra.mxu0 0
    %875 = vmatprep.subr.bf16.mxu0 0
    %876 = vmatpush1.bf16.msra.mxu0 0
    %877 = vmatprep.subr.bf16.mxu0 0
    %878 = vmatpush1.bf16.msra.mxu0 0
    %879 = vmatprep.subr.bf16.mxu0 0
    %880 = vmatpush1.bf16.msra.mxu0 0
    %881 = vmatprep.subr.bf16.mxu0 0
    %882 = vmatpush1.bf16.msra.mxu0 0
    %883 = vmatprep.subr.bf16.mxu0 0
    %884 = vmatpush1.bf16.msra.mxu0 0
    %885 = vmatprep.subr.bf16.mxu0 0
    %886 = vmatpush1.bf16.msra.mxu0 0
    %887 = vmatprep.subr.bf16.mxu0 0
    %888 = vmatpush1.bf16.msra.mxu0 0
    %889 = vmatprep.mubr.bf16.mxu0 0
    %890 = vmatmul.mubr.bf16.gmra.mrb[0].mxu0 %v161
    %v891 = vpop.f32.mrb[0].mxu0
    %v892 = vadd.f32 0.0, %v891
    %v893 = vpop.f32.mrb[0].mxu0
    %v894 = vpop.f32.mrb[0].mxu0
    %v895 = vadd.f32 0.0, %v894
    %v896 = vpop.f32.mrb[0].mxu0
    %897 = vmatprep.mubr.bf16.mxu0 0
    %898 = vmatmul.mubr.bf16.gmra.mrb[0].mxu0 %v164
    %v899 = vpop.f32.mrb[0].mxu0
    %v900 = vadd.f32 0.0, %v899
    %v901 = vpop.f32.mrb[0].mxu0
    %v902 = vpop.f32.mrb[0].mxu0
    %v903 = vadd.f32 0.0, %v902
    %v904 = vpop.f32.mrb[0].mxu0
    %905 = vdwg.mxu0
    %v906 = vpack.c.bf16 %v895, %v892
    %v907 = vpack.c.bf16 %v903, %v900
    %908 = vmatprep.subr.bf16.mxu0 0
    %909 = vmatpush1.bf16.msra.mxu0 %v855
    %910 = vmatprep.subr.bf16.mxu0 0
    %911 = vmatpush1.bf16.msra.mxu0 %v856
    %912 = vmatprep.subr.bf16.mxu0 0
    %913 = vmatpush1.bf16.msra.mxu0 0
    %914 = vmatprep.subr.bf16.mxu0 0
    %915 = vmatpush1.bf16.msra.mxu0 0
    %916 = vmatprep.subr.bf16.mxu0 0
    %917 = vmatpush1.bf16.msra.mxu0 0
    %918 = vmatprep.subr.bf16.mxu0 0
    %919 = vmatpush1.bf16.msra.mxu0 0
    %920 = vmatprep.subr.bf16.mxu0 0
    %921 = vmatpush1.bf16.msra.mxu0 0
    %922 = vmatprep.subr.bf16.mxu0 0
    %923 = vmatpush1.bf16.msra.mxu0 0
    %924 = vmatprep.subr.bf16.mxu0 0
    %925 = vmatpush1.bf16.msra.mxu0 0
    %926 = vmatprep.subr.bf16.mxu0 0
    %927 = vmatpush1.bf16.msra.mxu0 0
    %928 = vmatprep.subr.bf16.mxu0 0
    %929 = vmatpush1.bf16.msra.mxu0 0
    %930 = vmatprep.subr.bf16.mxu0 0
    %931 = vmatpush1.bf16.msra.mxu0 0
    %932 = vmatprep.subr.bf16.mxu0 0
    %933 = vmatpush1.bf16.msra.mxu0 0
    %934 = vmatprep.subr.bf16.mxu0 0
    %935 = vmatpush1.bf16.msra.mxu0 0
    %936 = vmatprep.subr.bf16.mxu0 0
    %937 = vmatpush1.bf16.msra.mxu0 0
    %938 = vmatprep.subr.bf16.mxu0 0
    %939 = vmatpush1.bf16.msra.mxu0 0
    %940 = vmatprep.mubr.bf16.mxu0 0
    %941 = vmatmul.mubr.bf16.gmra.mrb[0].mxu0 %v228
    %v942 = vpop.f32.mrb[0].mxu0
    %v943 = vadd.f32 0.0, %v942
    %v944 = vpop.f32.mrb[0].mxu0
    %v945 = vpop.f32.mrb[0].mxu0
    %v946 = vadd.f32 0.0, %v945
    %v947 = vpop.f32.mrb[0].mxu0
    %948 = vmatprep.mubr.bf16.mxu0 0
    %949 = vmatmul.mubr.bf16.gmra.mrb[0].mxu0 %v231
    %v950 = vpop.f32.mrb[0].mxu0
    %v951 = vadd.f32 0.0, %v950
    %v952 = vpop.f32.mrb[0].mxu0
    %v953 = vpop.f32.mrb[0].mxu0
    %v954 = vadd.f32 0.0, %v953
    %v955 = vpop.f32.mrb[0].mxu0
    %956 = vdwg.mxu0
    %v957 = vpack.c.bf16 %v946, %v943
    %v958 = vpack.c.bf16 %v954, %v951
    %s959 = scalar_lea.vmem [#allocation10], 64
    %v960 = vld [vmem:[%s959] sm:$0xf]
    %v961 = vld [vmem:[%s959 + $0x4] sm:$0xf]
    %v962 = vld [vmem:[%s959 + $0x8] sm:$0xf]
    %v963 = vld [vmem:[%s959 + $0xc] sm:$0xf]
    %v964 = vld [vmem:[%s959 + $0x10] sm:$0xf]
    %v965 = vld [vmem:[%s959 + $0x14] sm:$0xf]
    %v966 = vld [vmem:[%s959 + $0x18] sm:$0xf]
    %v967 = vld [vmem:[%s959 + $0x1c] sm:$0xf]
    %v968 = vld [vmem:[%s959 + $0x20] sm:$0xf]
    %v969 = vld [vmem:[%s959 + $0x24] sm:$0xf]
    %v970 = vld [vmem:[%s959 + $0x28] sm:$0xf]
    %v971 = vld [vmem:[%s959 + $0x2c] sm:$0xf]
    %v972 = vld [vmem:[%s959 + $0x30] sm:$0xf]
    %v973 = vld [vmem:[%s959 + $0x34] sm:$0xf]
    %v974 = vld [vmem:[%s959 + $0x38] sm:$0xf]
    %v975 = vld [vmem:[%s959 + $0x3c] sm:$0xf]
    %v976 = vld [vmem:[#allocation10] sm:$0xf]
    %v977 = vld [vmem:[#allocation10 + $0x4] sm:$0xf]
    %v978 = vld [vmem:[#allocation10 + $0x8] sm:$0xf]
    %v979 = vld [vmem:[#allocation10 + $0xc] sm:$0xf]
    %v980 = vld [vmem:[#allocation10 + $0x10] sm:$0xf]
    %v981 = vld [vmem:[#allocation10 + $0x14] sm:$0xf]
    %v982 = vld [vmem:[#allocation10 + $0x18] sm:$0xf]
    %v983 = vld [vmem:[#allocation10 + $0x1c] sm:$0xf]
    %v984 = vld [vmem:[#allocation10 + $0x20] sm:$0xf]
    %v985 = vld [vmem:[#allocation10 + $0x24] sm:$0xf]
    %v986 = vld [vmem:[#allocation10 + $0x28] sm:$0xf]
    %v987 = vld [vmem:[#allocation10 + $0x2c] sm:$0xf]
    %v988 = vld [vmem:[#allocation10 + $0x30] sm:$0xf]
    %v989 = vld [vmem:[#allocation10 + $0x34] sm:$0xf]
    %v990 = vld [vmem:[#allocation10 + $0x38] sm:$0xf]
    %v991 = vld [vmem:[#allocation10 + $0x3c] sm:$0xf]
    %v1008 = vunpack.c.l.b16 %v976
    %v1009 = vunpack.c.l.b16 %v977
    %v1010 = vunpack.c.l.b16 %v978
    %v1011 = vunpack.c.l.b16 %v979
    %v1012 = vunpack.c.l.b16 %v980
    %v1013 = vunpack.c.l.b16 %v981
    %v1014 = vunpack.c.l.b16 %v982
    %v1015 = vunpack.c.l.b16 %v983
    %v1016 = vunpack.c.l.b16 %v984
    %v1017 = vunpack.c.l.b16 %v985
    %v1018 = vunpack.c.l.b16 %v986
    %v1019 = vunpack.c.l.b16 %v987
    %v1020 = vunpack.c.l.b16 %v988
    %v1021 = vunpack.c.l.b16 %v989
    %v1022 = vunpack.c.l.b16 %v990
    %v1023 = vunpack.c.l.b16 %v991
    %v1024 = vpack.c.b16 %v1009, %v1008
    %v1025 = vpack.c.b16 %v1011, %v1010
    %v1026 = vpack.c.b16 %v1013, %v1012
    %v1027 = vpack.c.b16 %v1015, %v1014
    %v1028 = vpack.c.b16 %v1017, %v1016
    %v1029 = vpack.c.b16 %v1019, %v1018
    %v1030 = vpack.c.b16 %v1021, %v1020
    %v1031 = vpack.c.b16 %v1023, %v1022
    %1040 = vmatprep.subr.bf16.mxu0 0
    %1041 = vmatpush1.bf16.msra.mxu0 %v1024
    %1042 = vmatprep.subr.bf16.mxu0 0
    %1043 = vmatpush1.bf16.msra.mxu0 %v1025
    %1044 = vmatprep.subr.bf16.mxu0 0
    %1045 = vmatpush1.bf16.msra.mxu0 %v1026
    %1046 = vmatprep.subr.bf16.mxu0 0
    %1047 = vmatpush1.bf16.msra.mxu0 %v1027
    %1048 = vmatprep.subr.bf16.mxu0 0
    %1049 = vmatpush1.bf16.msra.mxu0 %v1028
    %1050 = vmatprep.subr.bf16.mxu0 0
    %1051 = vmatpush1.bf16.msra.mxu0 %v1029
    %1052 = vmatprep.subr.bf16.mxu0 0
    %1053 = vmatpush1.bf16.msra.mxu0 %v1030
    %1054 = vmatprep.subr.bf16.mxu0 0
    %1055 = vmatpush1.bf16.msra.mxu0 %v1031
    %1056 = vmatprep.subr.bf16.mxu0 0
    %1057 = vmatpush1.bf16.msra.mxu0 0
    %1058 = vmatprep.subr.bf16.mxu0 0
    %1059 = vmatpush1.bf16.msra.mxu0 0
    %1060 = vmatprep.subr.bf16.mxu0 0
    %1061 = vmatpush1.bf16.msra.mxu0 0
    %1062 = vmatprep.subr.bf16.mxu0 0
    %1063 = vmatpush1.bf16.msra.mxu0 0
    %1064 = vmatprep.subr.bf16.mxu0 0
    %1065 = vmatpush1.bf16.msra.mxu0 0
    %1066 = vmatprep.subr.bf16.mxu0 0
    %1067 = vmatpush1.bf16.msra.mxu0 0
    %1068 = vmatprep.subr.bf16.mxu0 0
    %1069 = vmatpush1.bf16.msra.mxu0 0
    %1070 = vmatprep.subr.bf16.mxu0 0
    %1071 = vmatpush1.bf16.msra.mxu0 0
    %1072 = vmatprep.mubr.bf16.mxu0 0
    %1073 = vmatmul.mubr.bf16.gmra.mrb[0].mxu0 %v906
    %v1074 = vpop.f32.mrb[0].mxu0
    %v1075 = vadd.f32 0.0, %v1074
    %v1076 = vpop.f32.mrb[0].mxu0
    %v1077 = vpop.f32.mrb[0].mxu0
    %v1078 = vadd.f32 0.0, %v1077
    %v1079 = vpop.f32.mrb[0].mxu0
    %1080 = vmatprep.mubr.bf16.mxu0 0
    %1081 = vmatmul.mubr.bf16.gmra.mrb[0].mxu0 %v907
    %v1082 = vpop.f32.mrb[0].mxu0
    %v1083 = vadd.f32 0.0, %v1082
    %v1084 = vpop.f32.mrb[0].mxu0
    %v1085 = vpop.f32.mrb[0].mxu0
    %v1086 = vadd.f32 0.0, %v1085
    %v1087 = vpop.f32.mrb[0].mxu0
    %1088 = vdwg.mxu0
    %v1105 = vunpack.c.l.b16 %v960
    %v1106 = vunpack.c.l.b16 %v961
    %v1107 = vunpack.c.l.b16 %v962
    %v1108 = vunpack.c.l.b16 %v963
    %v1109 = vunpack.c.l.b16 %v964
    %v1110 = vunpack.c.l.b16 %v965
    %v1111 = vunpack.c.l.b16 %v966
    %v1112 = vunpack.c.l.b16 %v967
    %v1113 = vunpack.c.l.b16 %v968
    %v1114 = vunpack.c.l.b16 %v969
    %v1115 = vunpack.c.l.b16 %v970
    %v1116 = vunpack.c.l.b16 %v971
    %v1117 = vunpack.c.l.b16 %v972
    %v1118 = vunpack.c.l.b16 %v973
    %v1119 = vunpack.c.l.b16 %v974
    %v1120 = vunpack.c.l.b16 %v975
    %v1121 = vpack.c.b16 %v1106, %v1105
    %v1122 = vpack.c.b16 %v1108, %v1107
    %v1123 = vpack.c.b16 %v1110, %v1109
    %v1124 = vpack.c.b16 %v1112, %v1111
    %v1125 = vpack.c.b16 %v1114, %v1113
    %v1126 = vpack.c.b16 %v1116, %v1115
    %v1127 = vpack.c.b16 %v1118, %v1117
    %v1128 = vpack.c.b16 %v1120, %v1119
    %1137 = vmatprep.subr.bf16.mxu0 0
    %1138 = vmatpush1.bf16.msra.mxu0 %v1121
    %1139 = vmatprep.subr.bf16.mxu0 0
    %1140 = vmatpush1.bf16.msra.mxu0 %v1122
    %1141 = vmatprep.subr.bf16.mxu0 0
    %1142 = vmatpush1.bf16.msra.mxu0 %v1123
    %1143 = vmatprep.subr.bf16.mxu0 0
    %1144 = vmatpush1.bf16.msra.mxu0 %v1124
    %1145 = vmatprep.subr.bf16.mxu0 0
    %1146 = vmatpush1.bf16.msra.mxu0 %v1125
    %1147 = vmatprep.subr.bf16.mxu0 0
    %1148 = vmatpush1.bf16.msra.mxu0 %v1126
    %1149 = vmatprep.subr.bf16.mxu0 0
    %1150 = vmatpush1.bf16.msra.mxu0 %v1127
    %1151 = vmatprep.subr.bf16.mxu0 0
    %1152 = vmatpush1.bf16.msra.mxu0 %v1128
    %1153 = vmatprep.subr.bf16.mxu0 0
    %1154 = vmatpush1.bf16.msra.mxu0 0
    %1155 = vmatprep.subr.bf16.mxu0 0
    %1156 = vmatpush1.bf16.msra.mxu0 0
    %1157 = vmatprep.subr.bf16.mxu0 0
    %1158 = vmatpush1.bf16.msra.mxu0 0
    %1159 = vmatprep.subr.bf16.mxu0 0
    %1160 = vmatpush1.bf16.msra.mxu0 0
    %1161 = vmatprep.subr.bf16.mxu0 0
    %1162 = vmatpush1.bf16.msra.mxu0 0
    %1163 = vmatprep.subr.bf16.mxu0 0
    %1164 = vmatpush1.bf16.msra.mxu0 0
    %1165 = vmatprep.subr.bf16.mxu0 0
    %1166 = vmatpush1.bf16.msra.mxu0 0
    %1167 = vmatprep.subr.bf16.mxu0 0
    %1168 = vmatpush1.bf16.msra.mxu0 0
    %1169 = vmatprep.mubr.bf16.mxu0 0
    %1170 = vmatmul.mubr.bf16.gmra.mrb[0].mxu0 %v855
    %v1171 = vpop.f32.mrb[0].mxu0
    %v1172 = vadd.f32 %v1075, %v1171
    %v1173 = vpop.f32.mrb[0].mxu0
    %v1174 = vpop.f32.mrb[0].mxu0
    %v1175 = vadd.f32 %v1078, %v1174
    %v1176 = vpop.f32.mrb[0].mxu0
    %1177 = vmatprep.mubr.bf16.mxu0 0
    %1178 = vmatmul.mubr.bf16.gmra.mrb[0].mxu0 %v856
    %v1179 = vpop.f32.mrb[0].mxu0
    %v1180 = vadd.f32 %v1083, %v1179
    %v1181 = vpop.f32.mrb[0].mxu0
    %v1182 = vpop.f32.mrb[0].mxu0
    %v1183 = vadd.f32 %v1086, %v1182
    %v1184 = vpop.f32.mrb[0].mxu0
    %1185 = vdwg.mxu0
    %s1186 = scalar_lea.vmem [#allocation10], 128
    %v1187 = vld [vmem:[%s1186] sm:$0xf]
    %v1188 = vld [vmem:[%s1186 + $0x4] sm:$0xf]
    %v1189 = vld [vmem:[%s1186 + $0x8] sm:$0xf]
    %v1190 = vld [vmem:[%s1186 + $0xc] sm:$0xf]
    %v1191 = vld [vmem:[%s1186 + $0x10] sm:$0xf]
    %v1192 = vld [vmem:[%s1186 + $0x14] sm:$0xf]
    %v1193 = vld [vmem:[%s1186 + $0x18] sm:$0xf]
    %v1194 = vld [vmem:[%s1186 + $0x1c] sm:$0xf]
    %v1195 = vld [vmem:[%s1186 + $0x20] sm:$0xf]
    %v1196 = vld [vmem:[%s1186 + $0x24] sm:$0xf]
    %v1197 = vld [vmem:[%s1186 + $0x28] sm:$0xf]
    %v1198 = vld [vmem:[%s1186 + $0x2c] sm:$0xf]
    %v1199 = vld [vmem:[%s1186 + $0x30] sm:$0xf]
    %v1200 = vld [vmem:[%s1186 + $0x34] sm:$0xf]
    %v1201 = vld [vmem:[%s1186 + $0x38] sm:$0xf]
    %v1202 = vld [vmem:[%s1186 + $0x3c] sm:$0xf]
    %v1219 = vunpack.c.l.b16 %v1187
    %v1220 = vunpack.c.l.b16 %v1188
    %v1221 = vunpack.c.l.b16 %v1189
    %v1222 = vunpack.c.l.b16 %v1190
    %v1223 = vunpack.c.l.b16 %v1191
    %v1224 = vunpack.c.l.b16 %v1192
    %v1225 = vunpack.c.l.b16 %v1193
    %v1226 = vunpack.c.l.b16 %v1194
    %v1227 = vunpack.c.l.b16 %v1195
    %v1228 = vunpack.c.l.b16 %v1196
    %v1229 = vunpack.c.l.b16 %v1197
    %v1230 = vunpack.c.l.b16 %v1198
    %v1231 = vunpack.c.l.b16 %v1199
    %v1232 = vunpack.c.l.b16 %v1200
    %v1233 = vunpack.c.l.b16 %v1201
    %v1234 = vunpack.c.l.b16 %v1202
    %v1235 = vpack.c.b16 %v1220, %v1219
    %v1236 = vpack.c.b16 %v1222, %v1221
    %v1237 = vpack.c.b16 %v1224, %v1223
    %v1238 = vpack.c.b16 %v1226, %v1225
    %v1239 = vpack.c.b16 %v1228, %v1227
    %v1240 = vpack.c.b16 %v1230, %v1229
    %v1241 = vpack.c.b16 %v1232, %v1231
    %v1242 = vpack.c.b16 %v1234, %v1233
    %1251 = vmatprep.subr.bf16.mxu0 0
    %1252 = vmatpush1.bf16.msra.mxu0 %v1235
    %1253 = vmatprep.subr.bf16.mxu0 0
    %1254 = vmatpush1.bf16.msra.mxu0 %v1236
    %1255 = vmatprep.subr.bf16.mxu0 0
    %1256 = vmatpush1.bf16.msra.mxu0 %v1237
    %1257 = vmatprep.subr.bf16.mxu0 0
    %1258 = vmatpush1.bf16.msra.mxu0 %v1238
    %1259 = vmatprep.subr.bf16.mxu0 0
    %1260 = vmatpush1.bf16.msra.mxu0 %v1239
    %1261 = vmatprep.subr.bf16.mxu0 0
    %1262 = vmatpush1.bf16.msra.mxu0 %v1240
    %1263 = vmatprep.subr.bf16.mxu0 0
    %1264 = vmatpush1.bf16.msra.mxu0 %v1241
    %1265 = vmatprep.subr.bf16.mxu0 0
    %1266 = vmatpush1.bf16.msra.mxu0 %v1242
    %1267 = vmatprep.subr.bf16.mxu0 0
    %1268 = vmatpush1.bf16.msra.mxu0 0
    %1269 = vmatprep.subr.bf16.mxu0 0
    %1270 = vmatpush1.bf16.msra.mxu0 0
    %1271 = vmatprep.subr.bf16.mxu0 0
    %1272 = vmatpush1.bf16.msra.mxu0 0
    %1273 = vmatprep.subr.bf16.mxu0 0
    %1274 = vmatpush1.bf16.msra.mxu0 0
    %1275 = vmatprep.subr.bf16.mxu0 0
    %1276 = vmatpush1.bf16.msra.mxu0 0
    %1277 = vmatprep.subr.bf16.mxu0 0
    %1278 = vmatpush1.bf16.msra.mxu0 0
    %1279 = vmatprep.subr.bf16.mxu0 0
    %1280 = vmatpush1.bf16.msra.mxu0 0
    %1281 = vmatprep.subr.bf16.mxu0 0
    %1282 = vmatpush1.bf16.msra.mxu0 0
    %1283 = vmatprep.mubr.bf16.mxu0 0
    %1284 = vmatmul.mubr.bf16.gmra.mrb[0].mxu0 %v957
    %v1285 = vpop.f32.mrb[0].mxu0
    %v1286 = vadd.f32 0.0, %v1285
    %v1287 = vpop.f32.mrb[0].mxu0
    %v1288 = vpop.f32.mrb[0].mxu0
    %v1289 = vadd.f32 0.0, %v1288
    %v1290 = vpop.f32.mrb[0].mxu0
    %1291 = vmatprep.mubr.bf16.mxu0 0
    %1292 = vmatmul.mubr.bf16.gmra.mrb[0].mxu0 %v958
    %v1293 = vpop.f32.mrb[0].mxu0
    %v1294 = vadd.f32 0.0, %v1293
    %v1295 = vpop.f32.mrb[0].mxu0
    %v1296 = vpop.f32.mrb[0].mxu0
    %v1297 = vadd.f32 0.0, %v1296
    %v1298 = vpop.f32.mrb[0].mxu0
    %1299 = vdwg.mxu0
    %v1300 = vadd.f32 %v1172, %v1286
    %v1301 = vadd.f32 %v1175, %v1289
    %v1302 = vadd.f32 %v1180, %v1294
    %v1303 = vadd.f32 %v1183, %v1297
    %1304 = vmatprep.subr.mxu0 0.0
    %1305 = vmatpush1.msra.mxu0 %v133
    %1306 = vmatprep.subr.mxu0 0.0
    %1307 = vmatpush1.msra.mxu0 %v134
    %1308 = vmatprep.subr.mxu0 0.0
    %1309 = vmatpush1.msra.mxu0 %v135
    %1310 = vmatprep.subr.mxu0 0.0
    %1311 = vmatpush1.msra.mxu0 %v136
    %1312 = vmatprep.subr.mxu0 0.0
    %1313 = vmatpush1.msra.mxu0 %v137
    %1314 = vmatprep.subr.mxu0 0.0
    %1315 = vmatpush1.msra.mxu0 %v138
    %1316 = vmatprep.subr.mxu0 0.0
    %1317 = vmatpush1.msra.mxu0 %v139
    %1318 = vmatprep.subr.mxu0 0.0
    %1319 = vmatpush1.msra.mxu0 %v140
    %1320 = vmatprep.subr.mxu0 0.0
    %1321 = vmatpush1.msra.mxu0 %v141
    %1322 = vmatprep.subr.mxu0 0.0
    %1323 = vmatpush1.msra.mxu0 %v142
    %1324 = vmatprep.subr.mxu0 0.0
    %1325 = vmatpush1.msra.mxu0 %v143
    %1326 = vmatprep.subr.mxu0 0.0
    %1327 = vmatpush1.msra.mxu0 %v144
    %1328 = vmatprep.subr.mxu0 0.0
    %1329 = vmatpush1.msra.mxu0 %v145
    %1330 = vmatprep.subr.mxu0 0.0
    %1331 = vmatpush1.msra.mxu0 %v146
    %1332 = vmatprep.subr.mxu0 0.0
    %1333 = vmatpush1.msra.mxu0 %v147
    %1334 = vmatprep.subr.mxu0 0.0
    %1335 = vmatpush1.msra.mxu0 %v148
    %1336 = vmatprep.subr.mxu0 0.0
    %1337 = vmatpush1.msra.mxu0 0.0
    %1338 = vmatprep.subr.mxu0 0.0
    %1339 = vmatpush1.msra.mxu0 0.0
    %1340 = vmatprep.subr.mxu0 0.0
    %1341 = vmatpush1.msra.mxu0 0.0
    %1342 = vmatprep.subr.mxu0 0.0
    %1343 = vmatpush1.msra.mxu0 0.0
    %1344 = vmatprep.subr.mxu0 0.0
    %1345 = vmatpush1.msra.mxu0 0.0
    %1346 = vmatprep.subr.mxu0 0.0
    %1347 = vmatpush1.msra.mxu0 0.0
    %1348 = vmatprep.subr.mxu0 0.0
    %1349 = vmatpush1.msra.mxu0 0.0
    %1350 = vmatprep.subr.mxu0 0.0
    %1351 = vmatpush1.msra.mxu0 0.0
    %1352 = vmatprep.subr.mxu0 0.0
    %1353 = vmatpush1.msra.mxu0 0.0
    %1354 = vmatprep.subr.mxu0 0.0
    %1355 = vmatpush1.msra.mxu0 0.0
    %1356 = vmatprep.subr.mxu0 0.0
    %1357 = vmatpush1.msra.mxu0 0.0
    %1358 = vmatprep.subr.mxu0 0.0
    %1359 = vmatpush1.msra.mxu0 0.0
    %1360 = vmatprep.subr.mxu0 0.0
    %1361 = vmatpush1.msra.mxu0 0.0
    %1362 = vmatprep.subr.mxu0 0.0
    %1363 = vmatpush1.msra.mxu0 0.0
    %1364 = vmatprep.subr.mxu0 0.0
    %1365 = vmatpush1.msra.mxu0 0.0
    %1366 = vmatprep.subr.mxu0 0.0
    %1367 = vmatpush1.msra.mxu0 0.0
    %1368 = vmatprep.mubr.f32.mxu0 0.0
    %1369 = vmatmul.mubr.f32.gmra.mrb[0].mxu0 %v1300
    %v1370 = vpop.f32.mrb[0].mxu0
    %v1371 = vadd.f32 0.0, %v1370
    %v1372 = vpop.f32.mrb[0].mxu0
    %1373 = vmatprep.mubr.f32.mxu0 0.0
    %1374 = vmatmul.mubr.f32.gmra.mrb[0].mxu0 %v1301
    %v1375 = vpop.f32.mrb[0].mxu0
    %v1376 = vadd.f32 0.0, %v1375
    %v1377 = vpop.f32.mrb[0].mxu0
    %1378 = vmatprep.mubr.f32.mxu0 0.0
    %1379 = vmatmul.mubr.f32.gmra.mrb[0].mxu0 %v1302
    %v1380 = vpop.f32.mrb[0].mxu0
    %v1381 = vadd.f32 0.0, %v1380
    %v1382 = vpop.f32.mrb[0].mxu0
    %1383 = vmatprep.mubr.f32.mxu0 0.0
    %1384 = vmatmul.mubr.f32.gmra.mrb[0].mxu0 %v1303
    %v1385 = vpop.f32.mrb[0].mxu0
    %v1386 = vadd.f32 0.0, %v1385
    %v1387 = vpop.f32.mrb[0].mxu0
    %1388 = vdwg.mxu0
    %v1389 = vadd.f32 %v1371, %v1376
    %v1390 = vadd.f32 %v1389, %v1381
    %v1391 = vadd.f32 %v1390, %v1386
    %v1392 = vrot.slane %v1391, 4
    %v1393 = vadd.f32 %v1391, %v1392
    %v1394 = vrot.slane %v1393, 2
    %v1395 = vadd.f32 %v1393, %v1394
    %v1396 = vrot.slane %v1395, 1
    %v1397 = vadd.f32 %v1395, %v1396
    %v1398 = vmul.f32 %v1300, %v1300
    %v1399 = vmul.f32 %v1301, %v1301
    %v1400 = vmul.f32 %v1302, %v1302
    %v1401 = vmul.f32 %v1303, %v1303
    %1402 = vmatprep.subr.mxu0 0.0
    %1403 = vmatpush1.msra.mxu0 %v133
    %1404 = vmatprep.subr.mxu0 0.0
    %1405 = vmatpush1.msra.mxu0 %v134
    %1406 = vmatprep.subr.mxu0 0.0
    %1407 = vmatpush1.msra.mxu0 %v135
    %1408 = vmatprep.subr.mxu0 0.0
    %1409 = vmatpush1.msra.mxu0 %v136
    %1410 = vmatprep.subr.mxu0 0.0
    %1411 = vmatpush1.msra.mxu0 %v137
    %1412 = vmatprep.subr.mxu0 0.0
    %1413 = vmatpush1.msra.mxu0 %v138
    %1414 = vmatprep.subr.mxu0 0.0
    %1415 = vmatpush1.msra.mxu0 %v139
    %1416 = vmatprep.subr.mxu0 0.0
    %1417 = vmatpush1.msra.mxu0 %v140
    %1418 = vmatprep.subr.mxu0 0.0
    %1419 = vmatpush1.msra.mxu0 %v141
    %1420 = vmatprep.subr.mxu0 0.0
    %1421 = vmatpush1.msra.mxu0 %v142
    %1422 = vmatprep.subr.mxu0 0.0
    %1423 = vmatpush1.msra.mxu0 %v143
    %1424 = vmatprep.subr.mxu0 0.0
    %1425 = vmatpush1.msra.mxu0 %v144
    %1426 = vmatprep.subr.mxu0 0.0
    %1427 = vmatpush1.msra.mxu0 %v145
    %1428 = vmatprep.subr.mxu0 0.0
    %1429 = vmatpush1.msra.mxu0 %v146
    %1430 = vmatprep.subr.mxu0 0.0
    %1431 = vmatpush1.msra.mxu0 %v147
    %1432 = vmatprep.subr.mxu0 0.0
    %1433 = vmatpush1.msra.mxu0 %v148
    %1434 = vmatprep.subr.mxu0 0.0
    %1435 = vmatpush1.msra.mxu0 0.0
    %1436 = vmatprep.subr.mxu0 0.0
    %1437 = vmatpush1.msra.mxu0 0.0
    %1438 = vmatprep.subr.mxu0 0.0
    %1439 = vmatpush1.msra.mxu0 0.0
    %1440 = vmatprep.subr.mxu0 0.0
    %1441 = vmatpush1.msra.mxu0 0.0
    %1442 = vmatprep.subr.mxu0 0.0
    %1443 = vmatpush1.msra.mxu0 0.0
    %1444 = vmatprep.subr.mxu0 0.0
    %1445 = vmatpush1.msra.mxu0 0.0
    %1446 = vmatprep.subr.mxu0 0.0
    %1447 = vmatpush1.msra.mxu0 0.0
    %1448 = vmatprep.subr.mxu0 0.0
    %1449 = vmatpush1.msra.mxu0 0.0
    %1450 = vmatprep.subr.mxu0 0.0
    %1451 = vmatpush1.msra.mxu0 0.0
    %1452 = vmatprep.subr.mxu0 0.0
    %1453 = vmatpush1.msra.mxu0 0.0
    %1454 = vmatprep.subr.mxu0 0.0
    %1455 = vmatpush1.msra.mxu0 0.0
    %1456 = vmatprep.subr.mxu0 0.0
    %1457 = vmatpush1.msra.mxu0 0.0
    %1458 = vmatprep.subr.mxu0 0.0
    %1459 = vmatpush1.msra.mxu0 0.0
    %1460 = vmatprep.subr.mxu0 0.0
    %1461 = vmatpush1.msra.mxu0 0.0
    %1462 = vmatprep.subr.mxu0 0.0
    %1463 = vmatpush1.msra.mxu0 0.0
    %1464 = vmatprep.subr.mxu0 0.0
    %1465 = vmatpush1.msra.mxu0 0.0
    %1466 = vmatprep.mubr.f32.mxu0 0.0
    %1467 = vmatmul.mubr.f32.gmra.mrb[0].mxu0 %v1398
    %v1468 = vpop.f32.mrb[0].mxu0
    %v1469 = vadd.f32 0.0, %v1468
    %v1470 = vpop.f32.mrb[0].mxu0
    %1471 = vmatprep.mubr.f32.mxu0 0.0
    %1472 = vmatmul.mubr.f32.gmra.mrb[0].mxu0 %v1399
    %v1473 = vpop.f32.mrb[0].mxu0
    %v1474 = vadd.f32 0.0, %v1473
    %v1475 = vpop.f32.mrb[0].mxu0
    %1476 = vmatprep.mubr.f32.mxu0 0.0
    %1477 = vmatmul.mubr.f32.gmra.mrb[0].mxu0 %v1400
    %v1478 = vpop.f32.mrb[0].mxu0
    %v1479 = vadd.f32 0.0, %v1478
    %v1480 = vpop.f32.mrb[0].mxu0
    %1481 = vmatprep.mubr.f32.mxu0 0.0
    %1482 = vmatmul.mubr.f32.gmra.mrb[0].mxu0 %v1401
    %v1483 = vpop.f32.mrb[0].mxu0
    %v1484 = vadd.f32 0.0, %v1483
    %v1485 = vpop.f32.mrb[0].mxu0
    %1486 = vdwg.mxu0
    %v1487 = vadd.f32 %v1469, %v1474
    %v1488 = vadd.f32 %v1487, %v1479
    %v1489 = vadd.f32 %v1488, %v1484
    %v1490 = vrot.slane %v1489, 4
    %v1491 = vadd.f32 %v1489, %v1490
    %v1492 = vrot.slane %v1491, 2
    %v1493 = vadd.f32 %v1491, %v1492
    %v1494 = vrot.slane %v1493, 1
    %v1495 = vadd.f32 %v1493, %v1494
    %v1496 = vmul.f32 %v1397, %v1397
    %v1497 = vsub.f32 %v1495, %v1496
    %v1498 = vmax.f32 %v1497, 0.0
    %v1499 = vadd.f32 %v1498, 1e-05
    %v1500 = vrsqrt.pop %v1499
    %v1501 = vsub.f32 %v1300, %v1397
    %v1502 = vsub.f32 %v1301, %v1397
    %v1503 = vsub.f32 %v1302, %v1397
    %v1504 = vsub.f32 %v1303, %v1397
    %v1505 = vld [vmem:[%s8] sm:$0x1]
    %v1506 = vmul.f32 %v1500, %v1505
    %v1507 = vlaneseq
    %v1508 = vshrl.u32 %v1507, 7
    %v1509 = vsub.s32 0, %v1508
    %v1510 = vrot.slane %v1506, %v1509
    %v1511 = vmul.f32 %v1501, %v1510
    %v1512 = vmul.f32 %v1502, %v1510
    %v1513 = vmul.f32 %v1503, %v1510
    %v1514 = vmul.f32 %v1504, %v1510
    %v1515 = vld [vmem:[%s9] sm:$0x1]
    %v1517 = vlaneseq
    %v1518 = vshrl.u32 %v1517, 7
    %v1519 = vsub.s32 0, %v1518
    %v1520 = vrot.slane %v1515, %v1519
    %v1522 = vadd.f32 %v1511, %v1520
    %v1523 = vadd.f32 %v1512, %v1520
    %v1524 = vadd.f32 %v1513, %v1520
    %v1525 = vadd.f32 %v1514, %v1520
    %v1526 = vadd.f32 %v1522, %v119
    %v1527 = vadd.f32 %v1523, %v120
    %v1528 = vadd.f32 %v1524, %v121
    %v1529 = vadd.f32 %v1525, %v122
    %v1530 = vmax.f32 %v1526, 0.0
    %v1531 = vmax.f32 %v1527, 0.0
    %v1532 = vmax.f32 %v1528, 0.0
    %v1533 = vmax.f32 %v1529, 0.0
    %1534 = vst [vmem:[#allocation13] sm:$0xff] %v1530
    %1535 = vst [vmem:[#allocation13 + $0x8] sm:$0xff] %v1531
    %1536 = vst [vmem:[#allocation13 + $0x10] sm:$0xff] %v1532
    %1537 = vst [vmem:[#allocation13 + $0x18] sm:$0xff] %v1533
    // Predicated region
    $region66: #{tpu_custom_call.1} parent=1 // pred_check
      _
    $region67: #{tpu_custom_call.1} parent=1 // pred_check_branch
      %1539 = sbr.rel (0) target = $region69
    $region68: #{tpu_custom_call.1} parent=1 // pred_region
      %s1541 = ssub.s32 512, 512
      %1542 = vsyncadd [#allocation4], %s1541
      %s1543 = sshll.u32 [#allocation13], 4
      %s1544 = int_to_ptr.vmem [resolvable:$true] %s1543
      %1549 = dma.vmem_to_hbm [thread:$0]  %s1544, 512, %s10, [#allocation4], 128, 128, 8
    $region69: #{tpu_custom_call.1} parent=1 // pred_fallthru
      _
    // Predicated region
    $region70: #{tpu_custom_call.1} parent=1 // pred_check
      _
    $region71: #{tpu_custom_call.1} parent=1 // pred_check_branch
      %1551 = sbr.rel (0) target = $region73
    $region72: #{tpu_custom_call.1} parent=1 // pred_region
      %1552 = dma.done [#allocation4], 512
    $region73: #{tpu_custom_call.1} parent=1 // pred_fallthru
      _
    %1553 = vsyncpa [#allocation3], 1
    %1554 = vsyncpa [#allocation6], 1
    %1555 = vsyncpa [#allocation9], 1
    %1556 = vsyncpa [#allocation12], 1
    %1557 = vsyncpa [#allocation4], 1

</llo_original>
